<compile_context>
chip_gen: v6e
topology: v6e:2x2x1
jax: 0.10.0
libtpu: 0.0.40
codegen_flags: <defaults>
</compile_context>

<pallas_src>
import jax
import jax.numpy as jnp
from jax.experimental import pallas as pl
from jax.experimental.pallas import tpu as pltpu

EPS = 1e-5


# ------------------------------ Pallas kernel -------------------------------

def _bottleneck_kernel(x_ref, w1_ref, s1_ref, b1_ref,
                       w2_ref, s2_ref, b2_ref,
                       w3_ref, s3_ref, b3_ref,
                       o_ref, h1p_ref):
    # x_ref : (1, H, W, Cin)      bf16   input block (one image)
    # w1_ref: (Cin, width)        bf16
    # w2_ref: (9*width, width)    bf16   3x3 weights, tap-major (kh*3+kw)
    # w3_ref: (width, Cout)       bf16
    # s*/b* : (1, C)              f32    folded BatchNorm scale / bias
    # o_ref : (1, H, W, Cout)     f32
    # h1p_ref: VMEM (H+2, W+2, width) bf16 scratch (padded conv1 output)
    _, H, W, Cin = x_ref.shape
    width = w1_ref.shape[1]
    Cout = w3_ref.shape[1]
    M = H * W

    x2d = x_ref[0].reshape(M, Cin)                                  # bf16

    # --- conv1 (1x1) + bn1 + relu -> padded VMEM scratch (halo for 3x3) ---
    h1 = jnp.dot(x2d, w1_ref[...], preferred_element_type=jnp.float32)
    h1 = jnp.maximum(h1 * s1_ref[...] + b1_ref[...], 0.0)
    h1p_ref[...] = jnp.zeros_like(h1p_ref)          # zero halo border (cheap)
    h1p_ref[pl.ds(1, H), pl.ds(1, W), :] = (
        h1.astype(h1p_ref.dtype).reshape(H, W, width))

    # --- conv2 (3x3, pad=1, stride=1) + bn2 + relu -----------------------
    # Single fused MXU contraction over 9*width; the 9 shifted taps are read
    # from the padded scratch (VMEM only, no HBM im2col).
    col = jnp.concatenate(
        [h1p_ref[pl.ds(kh, H), pl.ds(kw, W), :].reshape(M, width)
         for kh in range(3) for kw in range(3)],
        axis=-1)                                                    # (M, 9*width) bf16
    h2 = jnp.dot(col, w2_ref[...], preferred_element_type=jnp.float32)
    h2 = jnp.maximum(h2 * s2_ref[...] + b2_ref[...], 0.0).astype(jnp.bfloat16)

    # --- conv3 (1x1) + bn3 + residual add + relu -------------------------
    h3 = jnp.dot(h2, w3_ref[...], preferred_element_type=jnp.float32)
    h3 = h3 * s3_ref[...] + b3_ref[...] + x2d.astype(jnp.float32)
    o_ref[0] = jnp.maximum(h3, 0.0).reshape(H, W, Cout).astype(o_ref.dtype)


# --------------------------------- wrapper -----------------------------------

def _fold_bn(gamma, beta, mean, var):
    scale = gamma / jnp.sqrt(var + EPS)
    bias = beta - mean * scale
    return scale.astype(jnp.float32), bias.astype(jnp.float32)


def bottleneck_forward(x_nchw, params):
    """Pallas Bottleneck.forward (stride=1, downsample=None, eval-mode BN)."""
    N, Cin, H, W = x_nchw.shape
    w1 = params["w1"].astype(jnp.bfloat16)          # (Cin, width)
    w2 = params["w2col"].astype(jnp.bfloat16)       # (9*width, width)
    w3 = params["w3"].astype(jnp.bfloat16)          # (width, Cout)
    width, Cout = w3.shape
    assert Cin == Cout, "downsample=None requires inplanes == planes*expansion"

    s1, b1 = _fold_bn(*params["bn1"])
    s2, b2 = _fold_bn(*params["bn2"])
    s3, b3 = _fold_bn(*params["bn3"])

    # Channels-last, bf16 activations for MXU / halved HBM traffic.
    x_nhwc = jnp.transpose(x_nchw, (0, 2, 3, 1)).astype(jnp.bfloat16)

    hw = H * W
    flops = 2 * N * hw * (Cin * width + 9 * width * width + width * Cout)
    bytes_accessed = (N * hw * Cin * 2 + N * hw * Cout * 4
                      + (w1.size + w2.size + w3.size) * 2
                      + 2 * (2 * width + Cout) * 4)

    # Rough per-core VMEM working set (double-buffered blocks + weights +
    # scratch + in-kernel temporaries), used to set a v7x-safe limit.
    est = (2 * (hw * Cin * 2 + hw * Cout * 4)
           + (Cin * width + 9 * width * width + width * Cout) * 2
           + (H + 2) * (W + 2) * width * 2
           + hw * 9 * width * 2 * 2
           + hw * (width + Cout) * 4 * 2)
    vmem_limit = int(min(56 * 2**20, max(16 * 2**20, 2 * est)))

    out = pl.pallas_call(
        _bottleneck_kernel,
        out_shape=jax.ShapeDtypeStruct((N, H, W, Cout), jnp.float32),
        grid_spec=pltpu.PrefetchScalarGridSpec(
            num_scalar_prefetch=0,
            grid=(N,),
            in_specs=[
                pl.BlockSpec((1, H, W, Cin), lambda n: (n, 0, 0, 0)),
                pl.BlockSpec((Cin, width), lambda n: (0, 0)),
                pl.BlockSpec((1, width), lambda n: (0, 0)),
                pl.BlockSpec((1, width), lambda n: (0, 0)),
                pl.BlockSpec((9 * width, width), lambda n: (0, 0)),
                pl.BlockSpec((1, width), lambda n: (0, 0)),
                pl.BlockSpec((1, width), lambda n: (0, 0)),
                pl.BlockSpec((width, Cout), lambda n: (0, 0)),
                pl.BlockSpec((1, Cout), lambda n: (0, 0)),
                pl.BlockSpec((1, Cout), lambda n: (0, 0)),
            ],
            out_specs=pl.BlockSpec((1, H, W, Cout), lambda n: (n, 0, 0, 0)),
            scratch_shapes=[pltpu.VMEM((H + 2, W + 2, width), jnp.bfloat16)],
        ),
        compiler_params=pltpu.CompilerParams(
            dimension_semantics=("parallel",),   # megacore-shard the batch axis
            vmem_limit_bytes=vmem_limit,
        ),
        cost_estimate=pl.CostEstimate(
            flops=flops, transcendentals=0, bytes_accessed=bytes_accessed),
    )(x_nhwc, w1, s1.reshape(1, -1), b1.reshape(1, -1),
      w2, s2.reshape(1, -1), b2.reshape(1, -1),
      w3, s3.reshape(1, -1), b3.reshape(1, -1))

    return jnp.transpose(out, (0, 3, 1, 2))


# --------------------------- reference (plain JAX) ---------------------------

def bottleneck_reference(x_nchw, params, w2_hwio):
    """Mirrors the kernel's bf16-input / f32-accumulate numerics."""
    x = jnp.transpose(x_nchw, (0, 2, 3, 1)).astype(jnp.bfloat16)

    def bn(y, p):
        g, b, m, v = p
        return (y - m) / jnp.sqrt(v + EPS) * g + b

    h = jnp.einsum("nhwc,co->nhwo", x, params["w1"].astype(jnp.bfloat16),
                   preferred_element_type=jnp.float32)
    h = jax.nn.relu(bn(h, params["bn1"])).astype(jnp.bfloat16)
    h = jax.lax.conv_general_dilated(
        h, w2_hwio.astype(jnp.bfloat16), window_strides=(1, 1),
        padding=((1, 1), (1, 1)),
        dimension_numbers=("NHWC", "HWIO", "NHWC"),
        preferred_element_type=jnp.float32)
    h = jax.nn.relu(bn(h, params["bn2"])).astype(jnp.bfloat16)
    h = jnp.einsum("nhwc,co->nhwo", h, params["w3"].astype(jnp.bfloat16),
                   preferred_element_type=jnp.float32)
    h = jax.nn.relu(bn(h, params["bn3"]) + x.astype(jnp.float32))
    return jnp.transpose(h, (0, 3, 1, 2))


# ------------------------------------ main -----------------------------------

if __name__ == "__main__":
    # Small but lane-dense config: all channel dims are 128.
    planes, expansion, base_width = 32, 4, 256
    inplanes = planes * expansion                 # 128
    width = int(planes * (base_width / 64.0))     # 128
    out_ch = planes * expansion                   # 128
    N, H, W = 2, 8, 8

    key = jax.random.PRNGKey(0)
    ks = jax.random.split(key, 8)

    def bn_params(k, c):
        k1, k2, k3, k4 = jax.random.split(k, 4)
        gamma = jax.random.uniform(k1, (c,), jnp.float32, 0.5, 1.5)
        beta = 0.1 * jax.random.normal(k2, (c,), jnp.float32)
        mean = 0.1 * jax.random.normal(k3, (c,), jnp.float32)
        var = jax.random.uniform(k4, (c,), jnp.float32, 0.5, 1.5)
        return (gamma, beta, mean, var)

    # Conv weights generated channels-last (PyTorch OIHW would be a transpose).
    w1 = 0.1 * jax.random.normal(ks[0], (inplanes, width), jnp.float32)          # 1x1
    w2_hwio = 0.1 * jax.random.normal(ks[1], (3, 3, width, width), jnp.float32)  # 3x3
    w3 = 0.1 * jax.random.normal(ks[2], (width, out_ch), jnp.float32)            # 1x1

    params = {
        "w1": w1,
        "w2col": w2_hwio.reshape(9 * width, width),   # tap order kh*3 + kw
        "w3": w3,
        "bn1": bn_params(ks[3], width),
        "bn2": bn_params(ks[4], width),
        "bn3": bn_params(ks[5], out_ch),
    }

    x = jax.random.normal(ks[6], (N, inplanes, H, W), jnp.float32)

    y = jax.block_until_ready(bottleneck_forward(x, params))
    y_ref = bottleneck_reference(x, params, w2_hwio)

    assert y.shape == (N, out_ch, H, W), y.shape
    assert jnp.allclose(y, y_ref, atol=2e-2, rtol=2e-2), \
        float(jnp.max(jnp.abs(y - y_ref)))

    print("KERNEL_OK")
</pallas_src>

<mosaic_0001>
module attributes {stable_mosaic.version = 11 : i64} {
  func.func @_bottleneck_kernel(%arg0: i32, %arg1: memref<1x8x8x128xbf16, #tpu.memory_space<vmem>>, %arg2: memref<128x128xbf16, #tpu.memory_space<vmem>>, %arg3: memref<1x128xf32, #tpu.memory_space<vmem>>, %arg4: memref<1x128xf32, #tpu.memory_space<vmem>>, %arg5: memref<1152x128xbf16, #tpu.memory_space<vmem>>, %arg6: memref<1x128xf32, #tpu.memory_space<vmem>>, %arg7: memref<1x128xf32, #tpu.memory_space<vmem>>, %arg8: memref<128x128xbf16, #tpu.memory_space<vmem>>, %arg9: memref<1x128xf32, #tpu.memory_space<vmem>>, %arg10: memref<1x128xf32, #tpu.memory_space<vmem>>, %arg11: memref<1x8x8x128xf32, #tpu.memory_space<vmem>>, %arg12: memref<10x10x128xbf16, #tpu.memory_space<vmem>>) attributes {dimension_semantics = [#tpu.dimension_semantics<parallel>], iteration_bounds = array<i64: 2>, scalar_prefetch = 0 : i64, scratch_operands = 1 : i64, tpu.core_type = #tpu.core_type<tc>, window_params = [{transform_indices = @transform_0, window_bounds = array<i64: 1, 8, 8, 128>}, {pipeline_mode = #tpu.pipeline_mode<synchronous>, transform_indices = @transform_1, window_bounds = array<i64: 128, 128>}, {pipeline_mode = #tpu.pipeline_mode<synchronous>, transform_indices = @transform_2, window_bounds = array<i64: 1, 128>}, {pipeline_mode = #tpu.pipeline_mode<synchronous>, transform_indices = @transform_3, window_bounds = array<i64: 1, 128>}, {pipeline_mode = #tpu.pipeline_mode<synchronous>, transform_indices = @transform_4, window_bounds = array<i64: 1152, 128>}, {pipeline_mode = #tpu.pipeline_mode<synchronous>, transform_indices = @transform_5, window_bounds = array<i64: 1, 128>}, {pipeline_mode = #tpu.pipeline_mode<synchronous>, transform_indices = @transform_6, window_bounds = array<i64: 1, 128>}, {pipeline_mode = #tpu.pipeline_mode<synchronous>, transform_indices = @transform_7, window_bounds = array<i64: 128, 128>}, {pipeline_mode = #tpu.pipeline_mode<synchronous>, transform_indices = @transform_8, window_bounds = array<i64: 1, 128>}, {pipeline_mode = #tpu.pipeline_mode<synchronous>, transform_indices = @transform_9, window_bounds = array<i64: 1, 128>}, {transform_indices = @transform_10, window_bounds = array<i64: 1, 8, 8, 128>}]} {
    %c0 = arith.constant 0 : index
    %c0_0 = arith.constant 0 : index
    %c0_1 = arith.constant 0 : index
    %c0_2 = arith.constant 0 : index
    %0 = vector.load %arg1[%c0, %c0_0, %c0_1, %c0_2] : memref<1x8x8x128xbf16, #tpu.memory_space<vmem>>, vector<1x8x8x128xbf16>
    %1 = vector.shape_cast %0 : vector<1x8x8x128xbf16> to vector<8x8x128xbf16>
    %2 = vector.shape_cast %1 : vector<8x8x128xbf16> to vector<64x128xbf16>
    %c0_3 = arith.constant 0 : index
    %c0_4 = arith.constant 0 : index
    %3 = vector.load %arg2[%c0_3, %c0_4] : memref<128x128xbf16, #tpu.memory_space<vmem>>, vector<128x128xbf16>
    %cst = arith.constant dense<0.000000e+00> : vector<64x128xf32>
    %4 = tpu.matmul %2, %3, %cst {dimension_numbers = #tpu.dot_dimension_numbers<[1], [0], [0], [1], [0, 0, 1, 1], [], []>} : vector<64x128xbf16>, vector<128x128xbf16>, vector<64x128xf32> -> vector<64x128xf32>
    %c0_5 = arith.constant 0 : index
    %c0_6 = arith.constant 0 : index
    %5 = vector.load %arg3[%c0_5, %c0_6] : memref<1x128xf32, #tpu.memory_space<vmem>>, vector<1x128xf32>
    %6 = vector.broadcast %5 : vector<1x128xf32> to vector<64x128xf32>
    %7 = arith.mulf %4, %6 : vector<64x128xf32>
    %c0_7 = arith.constant 0 : index
    %c0_8 = arith.constant 0 : index
    %8 = vector.load %arg4[%c0_7, %c0_8] : memref<1x128xf32, #tpu.memory_space<vmem>>, vector<1x128xf32>
    %9 = vector.broadcast %8 : vector<1x128xf32> to vector<64x128xf32>
    %10 = arith.addf %7, %9 : vector<64x128xf32>
    %cst_9 = arith.constant 0.000000e+00 : f32
    %11 = vector.broadcast %cst_9 : f32 to vector<64x128xf32>
    %12 = arith.maximumf %10, %11 : vector<64x128xf32>
    %cst_10 = arith.constant 0.000000e+00 : bf16
    %13 = vector.broadcast %cst_10 : bf16 to vector<10x10x128xbf16>
    %c0_11 = arith.constant 0 : index
    %c0_12 = arith.constant 0 : index
    %c0_13 = arith.constant 0 : index
    %14 = vector.load %arg12[%c0_11, %c0_12, %c0_13] : memref<10x10x128xbf16, #tpu.memory_space<vmem>>, vector<10x10x128xbf16>
    tpu.vector_store %arg12[%c0_11, %c0_12, %c0_13], %13 {strides = array<i32>} : memref<10x10x128xbf16, #tpu.memory_space<vmem>>, vector<10x10x128xbf16>,
    %15 = arith.truncf %12 : vector<64x128xf32> to vector<64x128xbf16>
    %16 = vector.shape_cast %15 : vector<64x128xbf16> to vector<8x8x128xbf16>
    %c1 = arith.constant 1 : index
    %c1_14 = arith.constant 1 : index
    %c0_15 = arith.constant 0 : index
    %17 = vector.load %arg12[%c1, %c1_14, %c0_15] : memref<10x10x128xbf16, #tpu.memory_space<vmem>>, vector<8x8x128xbf16>
    tpu.vector_store %arg12[%c1, %c1_14, %c0_15], %16 {strides = array<i32>} : memref<10x10x128xbf16, #tpu.memory_space<vmem>>, vector<8x8x128xbf16>,
    %c0_16 = arith.constant 0 : index
    %c0_17 = arith.constant 0 : index
    %c0_18 = arith.constant 0 : index
    %18 = vector.load %arg12[%c0_16, %c0_17, %c0_18] : memref<10x10x128xbf16, #tpu.memory_space<vmem>>, vector<8x8x128xbf16>
    %19 = vector.shape_cast %18 : vector<8x8x128xbf16> to vector<64x128xbf16>
    %c0_19 = arith.constant 0 : index
    %c1_20 = arith.constant 1 : index
    %c0_21 = arith.constant 0 : index
    %20 = vector.load %arg12[%c0_19, %c1_20, %c0_21] : memref<10x10x128xbf16, #tpu.memory_space<vmem>>, vector<8x8x128xbf16>
    %21 = vector.shape_cast %20 : vector<8x8x128xbf16> to vector<64x128xbf16>
    %c0_22 = arith.constant 0 : index
    %c2 = arith.constant 2 : index
    %c0_23 = arith.constant 0 : index
    %22 = vector.load %arg12[%c0_22, %c2, %c0_23] : memref<10x10x128xbf16, #tpu.memory_space<vmem>>, vector<8x8x128xbf16>
    %23 = vector.shape_cast %22 : vector<8x8x128xbf16> to vector<64x128xbf16>
    %c1_24 = arith.constant 1 : index
    %c0_25 = arith.constant 0 : index
    %c0_26 = arith.constant 0 : index
    %24 = vector.load %arg12[%c1_24, %c0_25, %c0_26] : memref<10x10x128xbf16, #tpu.memory_space<vmem>>, vector<8x8x128xbf16>
    %25 = vector.shape_cast %24 : vector<8x8x128xbf16> to vector<64x128xbf16>
    %c1_27 = arith.constant 1 : index
    %c1_28 = arith.constant 1 : index
    %c0_29 = arith.constant 0 : index
    %26 = vector.load %arg12[%c1_27, %c1_28, %c0_29] : memref<10x10x128xbf16, #tpu.memory_space<vmem>>, vector<8x8x128xbf16>
    %27 = vector.shape_cast %26 : vector<8x8x128xbf16> to vector<64x128xbf16>
    %c1_30 = arith.constant 1 : index
    %c2_31 = arith.constant 2 : index
    %c0_32 = arith.constant 0 : index
    %28 = vector.load %arg12[%c1_30, %c2_31, %c0_32] : memref<10x10x128xbf16, #tpu.memory_space<vmem>>, vector<8x8x128xbf16>
    %29 = vector.shape_cast %28 : vector<8x8x128xbf16> to vector<64x128xbf16>
    %c2_33 = arith.constant 2 : index
    %c0_34 = arith.constant 0 : index
    %c0_35 = arith.constant 0 : index
    %30 = vector.load %arg12[%c2_33, %c0_34, %c0_35] : memref<10x10x128xbf16, #tpu.memory_space<vmem>>, vector<8x8x128xbf16>
    %31 = vector.shape_cast %30 : vector<8x8x128xbf16> to vector<64x128xbf16>
    %c2_36 = arith.constant 2 : index
    %c1_37 = arith.constant 1 : index
    %c0_38 = arith.constant 0 : index
    %32 = vector.load %arg12[%c2_36, %c1_37, %c0_38] : memref<10x10x128xbf16, #tpu.memory_space<vmem>>, vector<8x8x128xbf16>
    %33 = vector.shape_cast %32 : vector<8x8x128xbf16> to vector<64x128xbf16>
    %c2_39 = arith.constant 2 : index
    %c2_40 = arith.constant 2 : index
    %c0_41 = arith.constant 0 : index
    %34 = vector.load %arg12[%c2_39, %c2_40, %c0_41] : memref<10x10x128xbf16, #tpu.memory_space<vmem>>, vector<8x8x128xbf16>
    %35 = vector.shape_cast %34 : vector<8x8x128xbf16> to vector<64x128xbf16>
    %36 = tpu.concatenate %19, %21, %23, %25, %27, %29, %31, %33, %35 in 1 : vector<64x128xbf16>, vector<64x128xbf16>, vector<64x128xbf16>, vector<64x128xbf16>, vector<64x128xbf16>, vector<64x128xbf16>, vector<64x128xbf16>, vector<64x128xbf16>, vector<64x128xbf16> -> vector<64x1152xbf16>
    %c0_42 = arith.constant 0 : index
    %c0_43 = arith.constant 0 : index
    %37 = vector.load %arg5[%c0_42, %c0_43] : memref<1152x128xbf16, #tpu.memory_space<vmem>>, vector<1152x128xbf16>
    %cst_44 = arith.constant dense<0.000000e+00> : vector<64x128xf32>
    %38 = tpu.matmul %36, %37, %cst_44 {dimension_numbers = #tpu.dot_dimension_numbers<[1], [0], [0], [1], [0, 0, 1, 1], [], []>} : vector<64x1152xbf16>, vector<1152x128xbf16>, vector<64x128xf32> -> vector<64x128xf32>
    %c0_45 = arith.constant 0 : index
    %c0_46 = arith.constant 0 : index
    %39 = vector.load %arg6[%c0_45, %c0_46] : memref<1x128xf32, #tpu.memory_space<vmem>>, vector<1x128xf32>
    %40 = vector.broadcast %39 : vector<1x128xf32> to vector<64x128xf32>
    %41 = arith.mulf %38, %40 : vector<64x128xf32>
    %c0_47 = arith.constant 0 : index
    %c0_48 = arith.constant 0 : index
    %42 = vector.load %arg7[%c0_47, %c0_48] : memref<1x128xf32, #tpu.memory_space<vmem>>, vector<1x128xf32>
    %43 = vector.broadcast %42 : vector<1x128xf32> to vector<64x128xf32>
    %44 = arith.addf %41, %43 : vector<64x128xf32>
    %cst_49 = arith.constant 0.000000e+00 : f32
    %45 = vector.broadcast %cst_49 : f32 to vector<64x128xf32>
    %46 = arith.maximumf %44, %45 : vector<64x128xf32>
    %47 = arith.truncf %46 : vector<64x128xf32> to vector<64x128xbf16>
    %c0_50 = arith.constant 0 : index
    %c0_51 = arith.constant 0 : index
    %48 = vector.load %arg8[%c0_50, %c0_51] : memref<128x128xbf16, #tpu.memory_space<vmem>>, vector<128x128xbf16>
    %cst_52 = arith.constant dense<0.000000e+00> : vector<64x128xf32>
    %49 = tpu.matmul %47, %48, %cst_52 {dimension_numbers = #tpu.dot_dimension_numbers<[1], [0], [0], [1], [0, 0, 1, 1], [], []>} : vector<64x128xbf16>, vector<128x128xbf16>, vector<64x128xf32> -> vector<64x128xf32>
    %c0_53 = arith.constant 0 : index
    %c0_54 = arith.constant 0 : index
    %50 = vector.load %arg9[%c0_53, %c0_54] : memref<1x128xf32, #tpu.memory_space<vmem>>, vector<1x128xf32>
    %51 = vector.broadcast %50 : vector<1x128xf32> to vector<64x128xf32>
    %52 = arith.mulf %49, %51 : vector<64x128xf32>
    %c0_55 = arith.constant 0 : index
    %c0_56 = arith.constant 0 : index
    %53 = vector.load %arg10[%c0_55, %c0_56] : memref<1x128xf32, #tpu.memory_space<vmem>>, vector<1x128xf32>
    %54 = vector.broadcast %53 : vector<1x128xf32> to vector<64x128xf32>
    %55 = arith.addf %52, %54 : vector<64x128xf32>
    %56 = arith.extf %2 : vector<64x128xbf16> to vector<64x128xf32>
    %57 = arith.addf %55, %56 : vector<64x128xf32>
    %cst_57 = arith.constant 0.000000e+00 : f32
    %58 = vector.broadcast %cst_57 : f32 to vector<64x128xf32>
    %59 = arith.maximumf %57, %58 : vector<64x128xf32>
    %60 = vector.shape_cast %59 : vector<64x128xf32> to vector<8x8x128xf32>
    %c0_58 = arith.constant 0 : index
    %c0_59 = arith.constant 0 : index
    %c0_60 = arith.constant 0 : index
    %c0_61 = arith.constant 0 : index
    %61 = vector.load %arg11[%c0_58, %c0_59, %c0_60, %c0_61] : memref<1x8x8x128xf32, #tpu.memory_space<vmem>>, vector<1x8x8x128xf32>
    %62 = vector.shape_cast %61 : vector<1x8x8x128xf32> to vector<8x8x128xf32>
    %63 = vector.shape_cast %60 : vector<8x8x128xf32> to vector<1x8x8x128xf32>
    tpu.vector_store %arg11[%c0_58, %c0_59, %c0_60, %c0_61], %63 {strides = array<i32>} : memref<1x8x8x128xf32, #tpu.memory_space<vmem>>, vector<1x8x8x128xf32>,
    return
  }
  func.func @transform_0(%arg0: i32) -> (i32, i32, i32, i32) {
    %c0_i32 = arith.constant 0 : i32
    %c0_i32_0 = arith.constant 0 : i32
    %c0_i32_1 = arith.constant 0 : i32
    %c0_i32_2 = arith.constant 0 : i32
    return %arg0, %c0_i32, %c0_i32_0, %c0_i32_1 : i32, i32, i32, i32
  }
  func.func @transform_1(%arg0: i32) -> (i32, i32) {
    %c0_i32 = arith.constant 0 : i32
    %c0_i32_0 = arith.constant 0 : i32
    %c0_i32_1 = arith.constant 0 : i32
    return %c0_i32, %c0_i32_0 : i32, i32
  }
  func.func @transform_2(%arg0: i32) -> (i32, i32) {
    %c0_i32 = arith.constant 0 : i32
    %c0_i32_0 = arith.constant 0 : i32
    %c0_i32_1 = arith.constant 0 : i32
    return %c0_i32, %c0_i32_0 : i32, i32
  }
  func.func @transform_3(%arg0: i32) -> (i32, i32) {
    %c0_i32 = arith.constant 0 : i32
    %c0_i32_0 = arith.constant 0 : i32
    %c0_i32_1 = arith.constant 0 : i32
    return %c0_i32, %c0_i32_0 : i32, i32
  }
  func.func @transform_4(%arg0: i32) -> (i32, i32) {
    %c0_i32 = arith.constant 0 : i32
    %c0_i32_0 = arith.constant 0 : i32
    %c0_i32_1 = arith.constant 0 : i32
    return %c0_i32, %c0_i32_0 : i32, i32
  }
  func.func @transform_5(%arg0: i32) -> (i32, i32) {
    %c0_i32 = arith.constant 0 : i32
    %c0_i32_0 = arith.constant 0 : i32
    %c0_i32_1 = arith.constant 0 : i32
    return %c0_i32, %c0_i32_0 : i32, i32
  }
  func.func @transform_6(%arg0: i32) -> (i32, i32) {
    %c0_i32 = arith.constant 0 : i32
    %c0_i32_0 = arith.constant 0 : i32
    %c0_i32_1 = arith.constant 0 : i32
    return %c0_i32, %c0_i32_0 : i32, i32
  }
  func.func @transform_7(%arg0: i32) -> (i32, i32) {
    %c0_i32 = arith.constant 0 : i32
    %c0_i32_0 = arith.constant 0 : i32
    %c0_i32_1 = arith.constant 0 : i32
    return %c0_i32, %c0_i32_0 : i32, i32
  }
  func.func @transform_8(%arg0: i32) -> (i32, i32) {
    %c0_i32 = arith.constant 0 : i32
    %c0_i32_0 = arith.constant 0 : i32
    %c0_i32_1 = arith.constant 0 : i32
    return %c0_i32, %c0_i32_0 : i32, i32
  }
  func.func @transform_9(%arg0: i32) -> (i32, i32) {
    %c0_i32 = arith.constant 0 : i32
    %c0_i32_0 = arith.constant 0 : i32
    %c0_i32_1 = arith.constant 0 : i32
    return %c0_i32, %c0_i32_0 : i32, i32
  }
  func.func @transform_10(%arg0: i32) -> (i32, i32, i32, i32) {
    %c0_i32 = arith.constant 0 : i32
    %c0_i32_0 = arith.constant 0 : i32
    %c0_i32_1 = arith.constant 0 : i32
    %c0_i32_2 = arith.constant 0 : i32
    return %arg0, %c0_i32, %c0_i32_0, %c0_i32_1 : i32, i32, i32, i32
  }
}

</mosaic_0001>

<llo_original>
// kernel: tpu_custom_call.1
$region0: #{tpu_custom_call.1}
  #allocation0 [shape = 'u32[]', space=smem, size = 0x4, offset = 0x4, fixed_abs, tag = 'smem constant byte address 0x4 - core index']
  #allocation1 [shape = 'u32[144,128]{1,0:T(1,128)}', space=vmem, size = 0x12000, scoped, tag = 'internal scratch']
  #allocation2 [shape = 'bf16[10,10,128]{2,1,0:T(8,128)(2,1)}', space=vmem, size = 0xa000, scoped, tag = 'scratch operand']
  %s0 = inlined_call_operand.hbm [shape: bf16[2,8,8,128], index: 0, kind: input, shape index: {}]
  %s1 = inlined_call_operand.hbm [shape: bf16[128,128], index: 1, kind: input, shape index: {}]
  %s2 = inlined_call_operand.vmem [shape: f32[1,128], index: 2, kind: input, shape index: {}]
  %s3 = inlined_call_operand.vmem [shape: f32[1,128], index: 3, kind: input, shape index: {}]
  %s4 = inlined_call_operand.hbm [shape: bf16[1152,128], index: 4, kind: input, shape index: {}]
  %s5 = inlined_call_operand.vmem [shape: f32[1,128], index: 5, kind: input, shape index: {}]
  %s6 = inlined_call_operand.vmem [shape: f32[1,128], index: 6, kind: input, shape index: {}]
  %s7 = inlined_call_operand.hbm [shape: bf16[128,128], index: 7, kind: input, shape index: {}]
  %s8 = inlined_call_operand.vmem [shape: f32[1,128], index: 8, kind: input, shape index: {}]
  %s9 = inlined_call_operand.vmem [shape: f32[1,128], index: 9, kind: input, shape index: {}]
  %s10 = inlined_call_operand.hbm [shape: f32[2,8,8,128], index: 10, kind: output, shape index: {}]
  %s11 = sld [smem:[#allocation0]]
  $region89: #{tpu_custom_call.1} parent=0
    _
  %s13 = ssub.s32 1, %s11
  %s14 = scalar_select 0, %s13, %s11
  $region1: #{tpu_custom_call.1} parent=0
    #allocation3 [shape = 'u8[32768]{0}', space=vmem, size = 0x8000, scoped, tag = 'input window, operand 0']
    #allocation4 [shape = 's32[2]{0}', space=sflag, size = 0x8, scoped, tag = 'scoped memory for tpu_custom_call.1']
    #allocation5 [shape = 's32[2]{0}', space=sflag, size = 0x8, scoped, tag = 'scoped memory for tpu_custom_call.1']
    #allocation6 [shape = 'u8[32768]{0}', space=vmem, size = 0x8000, scoped, tag = 'input window, operand 1, single buffered']
    #allocation7 [shape = 's32[1]{0}', space=sflag, size = 0x4, scoped, tag = 'scoped memory for tpu_custom_call.1']
    #allocation8 [shape = 'u8[294912]{0}', space=vmem, size = 0x48000, scoped, tag = 'input window, operand 4, single buffered']
    #allocation9 [shape = 'u8[32768]{0}', space=vmem, size = 0x8000, scoped, tag = 'input window, operand 7, single buffered']
    #allocation10 [shape = 's32[1]{0}', space=sflag, size = 0x4, scoped, tag = 'scoped memory for tpu_custom_call.1']
    #allocation11 [shape = 'u8[65536]{0}', space=vmem, size = 0x10000, scoped, tag = 'output window, operand 0']
    %15 = vsyncpa [#allocation4], 0
    %s16 = scalar_lea.sflag [#allocation4], 1
    %17 = vsyncpa %s16, 0
    %18 = vsyncpa [#allocation7], 0
    %19 = vsyncpa [#allocation10], 0
    %20 = vsyncpa [#allocation5], 0
    %s21 = scalar_lea.sflag [#allocation5], 1
    %22 = vsyncpa %s21, 0
    loop: start=0, step=1, limit=4
    $region2: #{tpu_custom_call.1} parent=1 // loop_pre_header
      _
    $region3: #{tpu_custom_call.1} parent=1 // loop_header
      %s24 = sphi 0, %s28
      %p25 = scmp.ge.s32.totalorder %s24, 4
      %s34 = sphi 0, %s36
      %s37 = sphi 0, %s34
      %s38 = sphi 0, %s37
      %s54 = sphi 0, %s38
      %s58 = sphi 0, %s58
      %s60 = sphi 0, %s58
      %s61 = sphi 0, %s60
      %s75 = sphi 0, %s61
      %s79 = sphi 0, %s79
      %s81 = sphi 0, %s79
      %s82 = sphi 0, %s81
      %s96 = sphi 0, %s82
      %s100 = sphi 0, %s100
      %s102 = sphi 0, %s100
      %s103 = sphi 0, %s102
      %s117 = sphi 0, %s103
      %s121 = sphi 0, %s121
      %s123 = sphi 0, %s121
      %s124 = sphi 0, %s123
      %s138 = sphi 0, %s124
      %s142 = sphi 0, %s142
      %s144 = sphi 0, %s142
      %s145 = sphi 0, %s144
      %s159 = sphi 0, %s145
      %s163 = sphi 0, %s163
      %s165 = sphi 0, %s163
      %s166 = sphi 0, %s165
      %s180 = sphi 0, %s166
      %s184 = sphi 0, %s184
      %s186 = sphi 0, %s184
      %s187 = sphi 0, %s186
      %s201 = sphi 0, %s187
      %s205 = sphi 0, %s205
      %s207 = sphi 0, %s205
      %s208 = sphi 0, %s207
      %s222 = sphi 0, %s208
      %s226 = sphi 0, %s226
      %s228 = sphi 0, %s226
      %s229 = sphi 0, %s228
      %s243 = sphi 0, %s229
      %s249 = sphi 0, %s251
      %s252 = sphi 0, %s249
      %s253 = sphi 0, %s252
      %s269 = sphi 0, %s253
    $region4: #{tpu_custom_call.1} parent=1 // loop_header_branch
      %27 = sbr.rel (%p25) target = $region8
    $region5: #{tpu_custom_call.1} parent=1 // loop_body
      %s29 = ssub.s32 %s24, 1
      %s30 = ssub.s32 %s24, 2
      %s31 = sadd.s32 %s24, 1
      %s32 = ssub.s32 %s24, %s31
      %p33 = scmp.eq.s32.totalorder %s32, 0
      %s35 = sadd.s32 %s34, 1
      %s36 = scalar_select %p33, %s34, %s35
      %p39 = pneg %p33
      %p40 = scmp.eq.s32.totalorder %s24, 1
      %p41 = por %p39, %p40
      %p42 = scmp.ne.s32.totalorder %s34, %s37
      %p43 = scmp.eq.s32.totalorder %s24, 0
      %p44 = por %p42, %p43
      %p45 = scmp.ne.s32.totalorder %s34, %s37
      %p46 = scmp.eq.s32.totalorder %s29, 1
      %p47 = por %p45, %p46
      %p48 = scmp.ne.s32.totalorder %s37, %s38
      %p49 = scmp.eq.s32.totalorder %s29, 0
      %p50 = por %p48, %p49
      %p51 = scmp.ne.s32.totalorder %s37, %s38
      %p52 = scmp.eq.s32.totalorder %s30, 1
      %p53 = por %p51, %p52
      %p55 = scmp.ne.s32.totalorder %s38, %s54
      %p56 = scmp.eq.s32.totalorder %s30, 0
      %p57 = por %p55, %p56
      %s59 = sadd.s32 %s58, 1
      %p62 = scmp.eq.s32.totalorder %s24, 1
      %p63 = scmp.ne.s32.totalorder %s58, %s60
      %p64 = scmp.eq.s32.totalorder %s24, 0
      %p65 = por %p63, %p64
      %p66 = scmp.ne.s32.totalorder %s58, %s60
      %p67 = scmp.eq.s32.totalorder %s29, 1
      %p68 = por %p66, %p67
      %p69 = scmp.ne.s32.totalorder %s60, %s61
      %p70 = scmp.eq.s32.totalorder %s29, 0
      %p71 = por %p69, %p70
      %p72 = scmp.ne.s32.totalorder %s60, %s61
      %p73 = scmp.eq.s32.totalorder %s30, 1
      %p74 = por %p72, %p73
      %p76 = scmp.ne.s32.totalorder %s61, %s75
      %p77 = scmp.eq.s32.totalorder %s30, 0
      %p78 = por %p76, %p77
      %s80 = sadd.s32 %s79, 1
      %p83 = scmp.eq.s32.totalorder %s24, 1
      %p84 = scmp.ne.s32.totalorder %s79, %s81
      %p85 = scmp.eq.s32.totalorder %s24, 0
      %p86 = por %p84, %p85
      %p87 = scmp.ne.s32.totalorder %s79, %s81
      %p88 = scmp.eq.s32.totalorder %s29, 1
      %p89 = por %p87, %p88
      %p90 = scmp.ne.s32.totalorder %s81, %s82
      %p91 = scmp.eq.s32.totalorder %s29, 0
      %p92 = por %p90, %p91
      %p93 = scmp.ne.s32.totalorder %s81, %s82
      %p94 = scmp.eq.s32.totalorder %s30, 1
      %p95 = por %p93, %p94
      %p97 = scmp.ne.s32.totalorder %s82, %s96
      %p98 = scmp.eq.s32.totalorder %s30, 0
      %p99 = por %p97, %p98
      %s101 = sadd.s32 %s100, 1
      %p104 = scmp.eq.s32.totalorder %s24, 1
      %p105 = scmp.ne.s32.totalorder %s100, %s102
      %p106 = scmp.eq.s32.totalorder %s24, 0
      %p107 = por %p105, %p106
      %p108 = scmp.ne.s32.totalorder %s100, %s102
      %p109 = scmp.eq.s32.totalorder %s29, 1
      %p110 = por %p108, %p109
      %p111 = scmp.ne.s32.totalorder %s102, %s103
      %p112 = scmp.eq.s32.totalorder %s29, 0
      %p113 = por %p111, %p112
      %p114 = scmp.ne.s32.totalorder %s102, %s103
      %p115 = scmp.eq.s32.totalorder %s30, 1
      %p116 = por %p114, %p115
      %p118 = scmp.ne.s32.totalorder %s103, %s117
      %p119 = scmp.eq.s32.totalorder %s30, 0
      %p120 = por %p118, %p119
      %s122 = sadd.s32 %s121, 1
      %p125 = scmp.eq.s32.totalorder %s24, 1
      %p126 = scmp.ne.s32.totalorder %s121, %s123
      %p127 = scmp.eq.s32.totalorder %s24, 0
      %p128 = por %p126, %p127
      %p129 = scmp.ne.s32.totalorder %s121, %s123
      %p130 = scmp.eq.s32.totalorder %s29, 1
      %p131 = por %p129, %p130
      %p132 = scmp.ne.s32.totalorder %s123, %s124
      %p133 = scmp.eq.s32.totalorder %s29, 0
      %p134 = por %p132, %p133
      %p135 = scmp.ne.s32.totalorder %s123, %s124
      %p136 = scmp.eq.s32.totalorder %s30, 1
      %p137 = por %p135, %p136
      %p139 = scmp.ne.s32.totalorder %s124, %s138
      %p140 = scmp.eq.s32.totalorder %s30, 0
      %p141 = por %p139, %p140
      %s143 = sadd.s32 %s142, 1
      %p146 = scmp.eq.s32.totalorder %s24, 1
      %p147 = scmp.ne.s32.totalorder %s142, %s144
      %p148 = scmp.eq.s32.totalorder %s24, 0
      %p149 = por %p147, %p148
      %p150 = scmp.ne.s32.totalorder %s142, %s144
      %p151 = scmp.eq.s32.totalorder %s29, 1
      %p152 = por %p150, %p151
      %p153 = scmp.ne.s32.totalorder %s144, %s145
      %p154 = scmp.eq.s32.totalorder %s29, 0
      %p155 = por %p153, %p154
      %p156 = scmp.ne.s32.totalorder %s144, %s145
      %p157 = scmp.eq.s32.totalorder %s30, 1
      %p158 = por %p156, %p157
      %p160 = scmp.ne.s32.totalorder %s145, %s159
      %p161 = scmp.eq.s32.totalorder %s30, 0
      %p162 = por %p160, %p161
      %s164 = sadd.s32 %s163, 1
      %p167 = scmp.eq.s32.totalorder %s24, 1
      %p168 = scmp.ne.s32.totalorder %s163, %s165
      %p169 = scmp.eq.s32.totalorder %s24, 0
      %p170 = por %p168, %p169
      %p171 = scmp.ne.s32.totalorder %s163, %s165
      %p172 = scmp.eq.s32.totalorder %s29, 1
      %p173 = por %p171, %p172
      %p174 = scmp.ne.s32.totalorder %s165, %s166
      %p175 = scmp.eq.s32.totalorder %s29, 0
      %p176 = por %p174, %p175
      %p177 = scmp.ne.s32.totalorder %s165, %s166
      %p178 = scmp.eq.s32.totalorder %s30, 1
      %p179 = por %p177, %p178
      %p181 = scmp.ne.s32.totalorder %s166, %s180
      %p182 = scmp.eq.s32.totalorder %s30, 0
      %p183 = por %p181, %p182
      %s185 = sadd.s32 %s184, 1
      %p188 = scmp.eq.s32.totalorder %s24, 1
      %p189 = scmp.ne.s32.totalorder %s184, %s186
      %p190 = scmp.eq.s32.totalorder %s24, 0
      %p191 = por %p189, %p190
      %p192 = scmp.ne.s32.totalorder %s184, %s186
      %p193 = scmp.eq.s32.totalorder %s29, 1
      %p194 = por %p192, %p193
      %p195 = scmp.ne.s32.totalorder %s186, %s187
      %p196 = scmp.eq.s32.totalorder %s29, 0
      %p197 = por %p195, %p196
      %p198 = scmp.ne.s32.totalorder %s186, %s187
      %p199 = scmp.eq.s32.totalorder %s30, 1
      %p200 = por %p198, %p199
      %p202 = scmp.ne.s32.totalorder %s187, %s201
      %p203 = scmp.eq.s32.totalorder %s30, 0
      %p204 = por %p202, %p203
      %s206 = sadd.s32 %s205, 1
      %p209 = scmp.eq.s32.totalorder %s24, 1
      %p210 = scmp.ne.s32.totalorder %s205, %s207
      %p211 = scmp.eq.s32.totalorder %s24, 0
      %p212 = por %p210, %p211
      %p213 = scmp.ne.s32.totalorder %s205, %s207
      %p214 = scmp.eq.s32.totalorder %s29, 1
      %p215 = por %p213, %p214
      %p216 = scmp.ne.s32.totalorder %s207, %s208
      %p217 = scmp.eq.s32.totalorder %s29, 0
      %p218 = por %p216, %p217
      %p219 = scmp.ne.s32.totalorder %s207, %s208
      %p220 = scmp.eq.s32.totalorder %s30, 1
      %p221 = por %p219, %p220
      %p223 = scmp.ne.s32.totalorder %s208, %s222
      %p224 = scmp.eq.s32.totalorder %s30, 0
      %p225 = por %p223, %p224
      %s227 = sadd.s32 %s226, 1
      %p230 = scmp.eq.s32.totalorder %s24, 1
      %p231 = scmp.ne.s32.totalorder %s226, %s228
      %p232 = scmp.eq.s32.totalorder %s24, 0
      %p233 = por %p231, %p232
      %p234 = scmp.ne.s32.totalorder %s226, %s228
      %p235 = scmp.eq.s32.totalorder %s29, 1
      %p236 = por %p234, %p235
      %p237 = scmp.ne.s32.totalorder %s228, %s229
      %p238 = scmp.eq.s32.totalorder %s29, 0
      %p239 = por %p237, %p238
      %p240 = scmp.ne.s32.totalorder %s228, %s229
      %p241 = scmp.eq.s32.totalorder %s30, 1
      %p242 = por %p240, %p241
      %p244 = scmp.ne.s32.totalorder %s229, %s243
      %p245 = scmp.eq.s32.totalorder %s30, 0
      %p246 = por %p244, %p245
      %s247 = ssub.s32 %s24, %s31
      %p248 = scmp.eq.s32.totalorder %s247, 0
      %s250 = sadd.s32 %s249, 1
      %s251 = scalar_select %p248, %s249, %s250
      %p254 = pneg %p248
      %p255 = scmp.eq.s32.totalorder %s24, 1
      %p256 = por %p254, %p255
      %p257 = scmp.ne.s32.totalorder %s249, %s252
      %p258 = scmp.eq.s32.totalorder %s24, 0
      %p259 = por %p257, %p258
      %p260 = scmp.ne.s32.totalorder %s249, %s252
      %p261 = scmp.eq.s32.totalorder %s29, 1
      %p262 = por %p260, %p261
      %p263 = scmp.ne.s32.totalorder %s252, %s253
      %p264 = scmp.eq.s32.totalorder %s29, 0
      %p265 = por %p263, %p264
      %p266 = scmp.ne.s32.totalorder %s252, %s253
      %p267 = scmp.eq.s32.totalorder %s30, 1
      %p268 = por %p266, %p267
      %p270 = scmp.ne.s32.totalorder %s253, %s269
      %p271 = scmp.eq.s32.totalorder %s30, 0
      %p272 = por %p270, %p271
      %p273 = scmp.le.s32.totalorder 1, %s24
      %p274 = scmp.lt.s32.totalorder %s24, 3
      %p275 = pnand %p273, %p274
      %p276 = pneg %p275
      // Predicated region
      $region9: #{tpu_custom_call.1} parent=5 // pred_check
        _
      $region10: #{tpu_custom_call.1} parent=5 // pred_check_branch
        %278 = sbr.rel (%p275) target = $region12
      $region11: #{tpu_custom_call.1} parent=5 // pred_region
        %s279 = ssub.s32 %s24, 1
        // Predicated region
        $region13: #{tpu_custom_call.1} parent=11 // pred_check
          %p280 = pneg %p71
        $region14: #{tpu_custom_call.1} parent=11 // pred_check_branch
          %282 = sbr.rel (%p280) target = $region16
        $region15: #{tpu_custom_call.1} parent=11 // pred_region
          %s284 = ssub.s32 1024, 1024
          %285 = vsyncadd [#allocation7], %s284
          %s286 = sshll.u32 [#allocation6], 4
          %s287 = int_to_ptr.vmem [resolvable:$true] %s286
          %292 = dma.hbm_to_vmem [thread:$0]  %s1, 1024, %s287, [#allocation7], 64, 64, 4
        $region16: #{tpu_custom_call.1} parent=11 // pred_fallthru
          _
        // Predicated region
        $region17: #{tpu_custom_call.1} parent=11 // pred_check
          %p293 = pneg %p92
        $region18: #{tpu_custom_call.1} parent=11 // pred_check_branch
          %295 = sbr.rel (%p293) target = $region20
        $region19: #{tpu_custom_call.1} parent=11 // pred_region
          _
        $region20: #{tpu_custom_call.1} parent=11 // pred_fallthru
          _
        // Predicated region
        $region21: #{tpu_custom_call.1} parent=11 // pred_check
          %p296 = pneg %p113
        $region22: #{tpu_custom_call.1} parent=11 // pred_check_branch
          %298 = sbr.rel (%p296) target = $region24
        $region23: #{tpu_custom_call.1} parent=11 // pred_region
          _
        $region24: #{tpu_custom_call.1} parent=11 // pred_fallthru
          _
        // Predicated region
        $region25: #{tpu_custom_call.1} parent=11 // pred_check
          %p299 = pneg %p134
        $region26: #{tpu_custom_call.1} parent=11 // pred_check_branch
          %301 = sbr.rel (%p299) target = $region28
        $region27: #{tpu_custom_call.1} parent=11 // pred_region
          %s303 = ssub.s32 9216, 9216
          %304 = vsyncadd [#allocation7], %s303
          %s305 = sshll.u32 [#allocation8], 4
          %s306 = int_to_ptr.vmem [resolvable:$true] %s305
          %311 = dma.hbm_to_vmem [thread:$0]  %s4, 9216, %s306, [#allocation7], 64, 64, 4
        $region28: #{tpu_custom_call.1} parent=11 // pred_fallthru
          _
        // Predicated region
        $region29: #{tpu_custom_call.1} parent=11 // pred_check
          %p312 = pneg %p155
        $region30: #{tpu_custom_call.1} parent=11 // pred_check_branch
          %314 = sbr.rel (%p312) target = $region32
        $region31: #{tpu_custom_call.1} parent=11 // pred_region
          _
        $region32: #{tpu_custom_call.1} parent=11 // pred_fallthru
          _
        // Predicated region
        $region33: #{tpu_custom_call.1} parent=11 // pred_check
          %p315 = pneg %p176
        $region34: #{tpu_custom_call.1} parent=11 // pred_check_branch
          %317 = sbr.rel (%p315) target = $region36
        $region35: #{tpu_custom_call.1} parent=11 // pred_region
          _
        $region36: #{tpu_custom_call.1} parent=11 // pred_fallthru
          _
        // Predicated region
        $region37: #{tpu_custom_call.1} parent=11 // pred_check
          %p318 = pneg %p197
        $region38: #{tpu_custom_call.1} parent=11 // pred_check_branch
          %320 = sbr.rel (%p318) target = $region40
        $region39: #{tpu_custom_call.1} parent=11 // pred_region
          %s322 = ssub.s32 1024, 1024
          %323 = vsyncadd [#allocation10], %s322
          %s324 = sshll.u32 [#allocation9], 4
          %s325 = int_to_ptr.vmem [resolvable:$true] %s324
          %330 = dma.hbm_to_vmem [thread:$0]  %s7, 1024, %s325, [#allocation10], 64, 64, 4
        $region40: #{tpu_custom_call.1} parent=11 // pred_fallthru
          _
        // Predicated region
        $region41: #{tpu_custom_call.1} parent=11 // pred_check
          %p331 = pneg %p218
        $region42: #{tpu_custom_call.1} parent=11 // pred_check_branch
          %333 = sbr.rel (%p331) target = $region44
        $region43: #{tpu_custom_call.1} parent=11 // pred_region
          _
        $region44: #{tpu_custom_call.1} parent=11 // pred_fallthru
          _
        // Predicated region
        $region45: #{tpu_custom_call.1} parent=11 // pred_check
          %p334 = pneg %p239
        $region46: #{tpu_custom_call.1} parent=11 // pred_check_branch
          %336 = sbr.rel (%p334) target = $region48
        $region47: #{tpu_custom_call.1} parent=11 // pred_region
          _
        $region48: #{tpu_custom_call.1} parent=11 // pred_fallthru
          _
      $region12: #{tpu_custom_call.1} parent=5 // pred_fallthru
        _
      %p337 = scmp.lt.s32.totalorder %s24, 2
      // Predicated region
      $region49: #{tpu_custom_call.1} parent=5 // pred_check
        %p338 = pneg %p337
      $region50: #{tpu_custom_call.1} parent=5 // pred_check_branch
        %340 = sbr.rel (%p338) target = $region52
      $region51: #{tpu_custom_call.1} parent=5 // pred_region
        // Predicated region
        $region53: #{tpu_custom_call.1} parent=51 // pred_check
          %p341 = pneg %p44
        $region54: #{tpu_custom_call.1} parent=51 // pred_check_branch
          %343 = sbr.rel (%p341) target = $region56
        $region55: #{tpu_custom_call.1} parent=51 // pred_region
          %s344 = sand.u32 %s34, 1
          %s345 = scalar_lea.sflag [#allocation4], %s344
          %s346 = sand.u32 %s34, 1
          %s347 = smul.addr %s346, 32
          %s348 = scalar_lea.vmem [#allocation3], %s347
          %s350 = ssub.s32 512, 512
          %351 = vsyncadd %s345, %s350
          %s352 = smul.addr %s24, 8
          %s353 = smul.addr %s352, 64
          %s354 = scalar_lea.hbm %s0, %s353
          %s355 = sshll.u32 %s348, 4
          %s356 = int_to_ptr.vmem [resolvable:$true] %s355
          %361 = dma.hbm_to_vmem [thread:$0]  %s354, 512, %s356, %s345, 64, 64, 4
        $region56: #{tpu_custom_call.1} parent=51 // pred_fallthru
          _
      $region52: #{tpu_custom_call.1} parent=5 // pred_fallthru
        _
      %p362 = scmp.le.s32.totalorder 1, %s24
      %p363 = scmp.lt.s32.totalorder %s24, 3
      %p364 = pnand %p362, %p363
      %p365 = pneg %p364
      // Predicated region
      $region57: #{tpu_custom_call.1} parent=5 // pred_check
        _
      $region58: #{tpu_custom_call.1} parent=5 // pred_check_branch
        %367 = sbr.rel (%p364) target = $region60
      $region59: #{tpu_custom_call.1} parent=5 // pred_region
        %s368 = ssub.s32 %s24, 1
        %s369 = sand.u32 %s37, 1
        %s370 = scalar_lea.sflag [#allocation4], %s369
        %s371 = sand.u32 %s37, 1
        %s372 = smul.addr %s371, 32
        %s373 = scalar_lea.vmem [#allocation3], %s372
        // Predicated region
        $region61: #{tpu_custom_call.1} parent=59 // pred_check
          %p374 = pneg %p50
        $region62: #{tpu_custom_call.1} parent=59 // pred_check_branch
          %376 = sbr.rel (%p374) target = $region64
        $region63: #{tpu_custom_call.1} parent=59 // pred_region
          %377 = dma.done %s370, 512
        $region64: #{tpu_custom_call.1} parent=59 // pred_fallthru
          _
        // Predicated region
        $region65: #{tpu_custom_call.1} parent=59 // pred_check
          %p378 = pneg %p71
        $region66: #{tpu_custom_call.1} parent=59 // pred_check_branch
          %380 = sbr.rel (%p378) target = $region68
        $region67: #{tpu_custom_call.1} parent=59 // pred_region
          %381 = dma.done [#allocation7], 1024
        $region68: #{tpu_custom_call.1} parent=59 // pred_fallthru
          _
        // Predicated region
        $region69: #{tpu_custom_call.1} parent=59 // pred_check
          %p382 = pneg %p134
        $region70: #{tpu_custom_call.1} parent=59 // pred_check_branch
          %384 = sbr.rel (%p382) target = $region72
        $region71: #{tpu_custom_call.1} parent=59 // pred_region
          %385 = dma.done [#allocation7], 9216
        $region72: #{tpu_custom_call.1} parent=59 // pred_fallthru
          _
        // Predicated region
        $region73: #{tpu_custom_call.1} parent=59 // pred_check
          %p386 = pneg %p197
        $region74: #{tpu_custom_call.1} parent=59 // pred_check_branch
          %388 = sbr.rel (%p386) target = $region76
        $region75: #{tpu_custom_call.1} parent=59 // pred_region
          %389 = dma.done [#allocation10], 1024
        $region76: #{tpu_custom_call.1} parent=59 // pred_fallthru
          _
        %s390 = sand.u32 %s37, 1
        %s391 = scalar_lea.sflag [#allocation4], %s390
        %s392 = sand.u32 %s37, 1
        %s393 = smul.addr %s392, 32
        %s394 = scalar_lea.vmem [#allocation3], %s393
        %p395 = pneg %p50
        %p396 = pneg %p47
        %p397 = pneg %p71
        %p398 = pneg %p68
        %p399 = pneg %p92
        %p400 = pneg %p89
        %p401 = pneg %p113
        %p402 = pneg %p110
        %p403 = pneg %p134
        %p404 = pneg %p131
        %p405 = pneg %p155
        %p406 = pneg %p152
        %p407 = pneg %p176
        %p408 = pneg %p173
        %p409 = pneg %p197
        %p410 = pneg %p194
        %p411 = pneg %p218
        %p412 = pneg %p215
        %p413 = pneg %p239
        %p414 = pneg %p236
        %p415 = pneg %p265
        %p416 = pneg %p262
        %s417 = sand.u32 %s252, 1
        %s418 = scalar_lea.sflag [#allocation5], %s417
        %s419 = sand.u32 %s252, 1
        %s420 = smul.addr %s419, 64
        %s421 = scalar_lea.vmem [#allocation11], %s420
        %v423 = vld [vmem:[%s373] sm:$0xf]
        %v424 = vld [vmem:[%s373 + $0x4] sm:$0xf]
        %v425 = vld [vmem:[%s373 + $0x8] sm:$0xf]
        %v426 = vld [vmem:[%s373 + $0xc] sm:$0xf]
        %v427 = vld [vmem:[%s373 + $0x10] sm:$0xf]
        %v428 = vld [vmem:[%s373 + $0x14] sm:$0xf]
        %v429 = vld [vmem:[%s373 + $0x18] sm:$0xf]
        %v430 = vld [vmem:[%s373 + $0x1c] sm:$0xf]
        %v431 = vld [vmem:[#allocation6] sm:$0xf]
        %v432 = vld [vmem:[#allocation6 + $0x4] sm:$0xf]
        %v433 = vld [vmem:[#allocation6 + $0x8] sm:$0xf]
        %v434 = vld [vmem:[#allocation6 + $0xc] sm:$0xf]
        %v435 = vld [vmem:[#allocation6 + $0x10] sm:$0xf]
        %v436 = vld [vmem:[#allocation6 + $0x14] sm:$0xf]
        %v437 = vld [vmem:[#allocation6 + $0x18] sm:$0xf]
        %v438 = vld [vmem:[#allocation6 + $0x1c] sm:$0xf]
        %v439 = vld [vmem:[#allocation6 + $0x20] sm:$0xf]
        %v440 = vld [vmem:[#allocation6 + $0x24] sm:$0xf]
        %v441 = vld [vmem:[#allocation6 + $0x28] sm:$0xf]
        %v442 = vld [vmem:[#allocation6 + $0x2c] sm:$0xf]
        %v443 = vld [vmem:[#allocation6 + $0x30] sm:$0xf]
        %v444 = vld [vmem:[#allocation6 + $0x34] sm:$0xf]
        %v445 = vld [vmem:[#allocation6 + $0x38] sm:$0xf]
        %v446 = vld [vmem:[#allocation6 + $0x3c] sm:$0xf]
        %v455 = vunpack.c.l.b16 %v423
        %v456 = vunpack.c.l.b16 %v424
        %v457 = vunpack.c.l.b16 %v425
        %v458 = vunpack.c.l.b16 %v426
        %v459 = vunpack.c.l.b16 %v427
        %v460 = vunpack.c.l.b16 %v428
        %v461 = vunpack.c.l.b16 %v429
        %v462 = vunpack.c.l.b16 %v430
        %v463 = vpack.c.b16 %v456, %v455
        %v464 = vpack.c.b16 %v458, %v457
        %v465 = vpack.c.b16 %v460, %v459
        %v466 = vpack.c.b16 %v462, %v461
        %v487 = vunpack.c.l.b16 %v431
        %v488 = vunpack.c.l.b16 %v432
        %v489 = vunpack.c.l.b16 %v433
        %v490 = vunpack.c.l.b16 %v434
        %v491 = vunpack.c.l.b16 %v435
        %v492 = vunpack.c.l.b16 %v436
        %v493 = vunpack.c.l.b16 %v437
        %v494 = vunpack.c.l.b16 %v438
        %v495 = vunpack.c.l.b16 %v439
        %v496 = vunpack.c.l.b16 %v440
        %v497 = vunpack.c.l.b16 %v441
        %v498 = vunpack.c.l.b16 %v442
        %v499 = vunpack.c.l.b16 %v443
        %v500 = vunpack.c.l.b16 %v444
        %v501 = vunpack.c.l.b16 %v445
        %v502 = vunpack.c.l.b16 %v446
        %v503 = vpack.c.b16 %v488, %v487
        %v504 = vpack.c.b16 %v490, %v489
        %v505 = vpack.c.b16 %v492, %v491
        %v506 = vpack.c.b16 %v494, %v493
        %v507 = vpack.c.b16 %v496, %v495
        %v508 = vpack.c.b16 %v498, %v497
        %v509 = vpack.c.b16 %v500, %v499
        %v510 = vpack.c.b16 %v502, %v501
        %519 = vmatprep.subr.bf16.mxu0 0
        %520 = vmatpush1.bf16.msra.mxu0 %v510
        %521 = vmatprep.subr.bf16.mxu0 0
        %522 = vmatpush1.bf16.msra.mxu0 %v509
        %523 = vmatprep.subr.bf16.mxu0 0
        %524 = vmatpush1.bf16.msra.mxu0 %v508
        %525 = vmatprep.subr.bf16.mxu0 0
        %526 = vmatpush1.bf16.msra.mxu0 %v507
        %527 = vmatprep.subr.bf16.mxu0 0
        %528 = vmatpush1.bf16.msra.mxu0 %v506
        %529 = vmatprep.subr.bf16.mxu0 0
        %530 = vmatpush1.bf16.msra.mxu0 %v505
        %531 = vmatprep.subr.bf16.mxu0 0
        %532 = vmatpush1.bf16.msra.mxu0 %v504
        %533 = vmatprep.subr.bf16.mxu0 0
        %534 = vmatpush1.bf16.msra.mxu0 %v503
        %535 = vmatprep.subr.bf16.mxu0 0
        %536 = vmatpush2.bf16.msra.mxu0 0
        %537 = vmatprep.subr.bf16.mxu0 0
        %538 = vmatpush2.bf16.msra.mxu0 0
        %539 = vmatprep.subr.bf16.mxu0 0
        %540 = vmatpush2.bf16.msra.mxu0 0
        %541 = vmatprep.subr.bf16.mxu0 0
        %542 = vmatpush2.bf16.msra.mxu0 0
        %543 = vmatprep.subr.bf16.mxu0 0
        %544 = vmatpush2.bf16.msra.mxu0 0
        %545 = vmatprep.subr.bf16.mxu0 0
        %546 = vmatpush2.bf16.msra.mxu0 0
        %547 = vmatprep.subr.bf16.mxu0 0
        %548 = vmatpush2.bf16.msra.mxu0 0
        %549 = vmatprep.subr.bf16.mxu0 0
        %550 = vmatpush2.bf16.msra.mxu0 0
        %551 = vmatprep.mubr.bf16.mxu0 0
        %552 = vmatmul.mubr.bf16.gmra.mxu0 %v463
        %v553 = vpop.f32.mrf.mxu0
        %v554 = vadd.f32 0.0, %v553
        %v555 = vpop.f32.mrf.mxu0
        %v556 = vpop.f32.mrf.mxu0
        %v557 = vadd.f32 0.0, %v556
        %v558 = vpop.f32.mrf.mxu0
        %559 = vmatprep.mubr.bf16.mxu0 0
        %560 = vmatmul.mubr.bf16.gmra.mxu0 %v464
        %v561 = vpop.f32.mrf.mxu0
        %v562 = vadd.f32 0.0, %v561
        %v563 = vpop.f32.mrf.mxu0
        %v564 = vpop.f32.mrf.mxu0
        %v565 = vadd.f32 0.0, %v564
        %v566 = vpop.f32.mrf.mxu0
        %567 = vmatprep.mubr.bf16.mxu0 0
        %568 = vmatmul.mubr.bf16.gmra.mxu0 %v465
        %v569 = vpop.f32.mrf.mxu0
        %v570 = vadd.f32 0.0, %v569
        %v571 = vpop.f32.mrf.mxu0
        %v572 = vpop.f32.mrf.mxu0
        %v573 = vadd.f32 0.0, %v572
        %v574 = vpop.f32.mrf.mxu0
        %575 = vmatprep.mubr.bf16.mxu0 0
        %576 = vmatmul.mubr.bf16.gmra.mxu0 %v466
        %v577 = vpop.f32.mrf.mxu0
        %v578 = vadd.f32 0.0, %v577
        %v579 = vpop.f32.mrf.mxu0
        %v580 = vpop.f32.mrf.mxu0
        %v581 = vadd.f32 0.0, %v580
        %v582 = vpop.f32.mrf.mxu0
        %583 = vdwg.mxu0
        %v584 = vld [vmem:[%s2] sm:$0x1]
        %v586 = vlaneseq
        %v587 = vshrl.u32 %v586, 7
        %v588 = vsub.s32 0, %v587
        %v589 = vrot.slane %v584, %v588
        %v591 = vmul.f32 %v554, %v589
        %v592 = vmul.f32 %v557, %v589
        %v593 = vmul.f32 %v562, %v589
        %v594 = vmul.f32 %v565, %v589
        %v595 = vmul.f32 %v570, %v589
        %v596 = vmul.f32 %v573, %v589
        %v597 = vmul.f32 %v578, %v589
        %v598 = vmul.f32 %v581, %v589
        %v599 = vld [vmem:[%s3] sm:$0x1]
        %v601 = vlaneseq
        %v602 = vshrl.u32 %v601, 7
        %v603 = vsub.s32 0, %v602
        %v604 = vrot.slane %v599, %v603
        %v606 = vadd.f32 %v591, %v604
        %v607 = vadd.f32 %v592, %v604
        %v608 = vadd.f32 %v593, %v604
        %v609 = vadd.f32 %v594, %v604
        %v610 = vadd.f32 %v595, %v604
        %v611 = vadd.f32 %v596, %v604
        %v612 = vadd.f32 %v597, %v604
        %v613 = vadd.f32 %v598, %v604
        %v614 = vmax.f32 %v606, 0.0
        %v615 = vmax.f32 %v607, 0.0
        %v616 = vmax.f32 %v608, 0.0
        %v617 = vmax.f32 %v609, 0.0
        %v618 = vmax.f32 %v610, 0.0
        %v619 = vmax.f32 %v611, 0.0
        %v620 = vmax.f32 %v612, 0.0
        %v621 = vmax.f32 %v613, 0.0
        %622 = vst [vmem:[#allocation2] sm:$0xf] 0
        %623 = vst [vmem:[#allocation2 + $0x4] sm:$0x1] 0
        %624 = vst [vmem:[#allocation2 + $0x8] sm:$0xf] 0
        %625 = vst [vmem:[#allocation2 + $0xc] sm:$0x1] 0
        %626 = vst [vmem:[#allocation2 + $0x10] sm:$0xf] 0
        %627 = vst [vmem:[#allocation2 + $0x14] sm:$0x1] 0
        %628 = vst [vmem:[#allocation2 + $0x18] sm:$0xf] 0
        %629 = vst [vmem:[#allocation2 + $0x1c] sm:$0x1] 0
        %630 = vst [vmem:[#allocation2 + $0x20] sm:$0xf] 0
        %631 = vst [vmem:[#allocation2 + $0x24] sm:$0x1] 0
        %632 = vst [vmem:[#allocation2 + $0x28] sm:$0xf] 0
        %633 = vst [vmem:[#allocation2 + $0x2c] sm:$0x1] 0
        %634 = vst [vmem:[#allocation2 + $0x30] sm:$0xf] 0
        %635 = vst [vmem:[#allocation2 + $0x34] sm:$0x1] 0
        %636 = vst [vmem:[#allocation2 + $0x38] sm:$0xf] 0
        %637 = vst [vmem:[#allocation2 + $0x3c] sm:$0x1] 0
        %638 = vst [vmem:[#allocation2 + $0x40] sm:$0xf] 0
        %639 = vst [vmem:[#allocation2 + $0x44] sm:$0x1] 0
        %640 = vst [vmem:[#allocation2 + $0x48] sm:$0xf] 0
        %641 = vst [vmem:[#allocation2 + $0x4c] sm:$0x1] 0
        %v642 = vpack.c.bf16 %v615, %v614
        %v643 = vpack.c.bf16 %v617, %v616
        %v644 = vpack.c.bf16 %v619, %v618
        %v645 = vpack.c.bf16 %v621, %v620
        %v650 = vunpack.c.l.b16 %v642
        %v651 = vunpack.c.h.b16 %v642
        %v652 = vunpack.c.l.b16 %v643
        %v653 = vunpack.c.h.b16 %v643
        %v654 = vunpack.c.l.b16 %v644
        %v655 = vunpack.c.h.b16 %v644
        %v656 = vunpack.c.l.b16 %v645
        %v657 = vunpack.c.h.b16 %v645
        %v658 = vpack.c.b16 %v650, %v650
        %v659 = vpack.c.b16 %v651, %v651
        %v660 = vpack.c.b16 %v652, %v652
        %v661 = vpack.c.b16 %v653, %v653
        %v662 = vpack.c.b16 %v654, %v654
        %v663 = vpack.c.b16 %v655, %v655
        %v664 = vpack.c.b16 %v656, %v656
        %v665 = vpack.c.b16 %v657, %v657
        %v667 = vshrl.u32 %v658, 16
        %v669 = vrot.slane %v667, 7
        %v670 = vshll.u32 %v658, 16
        %v672 = vor.u32 %v669, %v670
        %v673 = vrot.slane %v669, 4
        %v675 = vshrl.u32 %v659, 16
        %v677 = vrot.slane %v675, 7
        %v678 = vshll.u32 %v659, 16
        %v680 = vor.u32 %v677, %v678
        %v681 = vrot.slane %v677, 4
        %v683 = vshrl.u32 %v660, 16
        %v685 = vrot.slane %v683, 7
        %v686 = vshll.u32 %v660, 16
        %v688 = vor.u32 %v685, %v686
        %v689 = vrot.slane %v685, 4
        %v691 = vshrl.u32 %v661, 16
        %v693 = vrot.slane %v691, 7
        %v694 = vshll.u32 %v661, 16
        %v696 = vor.u32 %v693, %v694
        %v697 = vrot.slane %v693, 4
        %v699 = vshrl.u32 %v662, 16
        %v701 = vrot.slane %v699, 7
        %v702 = vshll.u32 %v662, 16
        %v704 = vor.u32 %v701, %v702
        %v705 = vrot.slane %v701, 4
        %v707 = vshrl.u32 %v663, 16
        %v709 = vrot.slane %v707, 7
        %v710 = vshll.u32 %v663, 16
        %v712 = vor.u32 %v709, %v710
        %v713 = vrot.slane %v709, 4
        %v715 = vshrl.u32 %v664, 16
        %v717 = vrot.slane %v715, 7
        %v718 = vshll.u32 %v664, 16
        %v720 = vor.u32 %v717, %v718
        %v721 = vrot.slane %v717, 4
        %v723 = vshrl.u32 %v665, 16
        %v725 = vrot.slane %v723, 7
        %v726 = vshll.u32 %v665, 16
        %v728 = vor.u32 %v725, %v726
        %v729 = vrot.slane %v725, 4
        %s746 = scalar_lea.vmem [#allocation2], 8
        %vm747 = vcmask 1043456
        %vm748 = vsmask.f32 7938
        %vm749 = vmand %vm747, %vm748
        %v750 = vld [vmem:[%s746] sm:$0xf]
        %v751 = vsel %vm749, %v672, %v750
        %752 = vst [vmem:[%s746] sm:$0xf] %v751
        %vm753 = vcmask 1040384
        %vm754 = vsmask.f32 256
        %vm755 = vmand %vm753, %vm754
        %v756 = vld [vmem:[%s746 + $0x4] sm:$0x1]
        %v757 = vsel %vm755, %v673, %v756
        %758 = vst [vmem:[%s746 + $0x4] sm:$0x1] %v757
        %v759 = vld [vmem:[%s746 + $0x8] sm:$0xf]
        %v760 = vsel %vm749, %v680, %v759
        %761 = vst [vmem:[%s746 + $0x8] sm:$0xf] %v760
        %v762 = vld [vmem:[%s746 + $0xc] sm:$0x1]
        %v763 = vsel %vm755, %v681, %v762
        %764 = vst [vmem:[%s746 + $0xc] sm:$0x1] %v763
        %v765 = vld [vmem:[%s746 + $0x10] sm:$0xf]
        %v766 = vsel %vm749, %v688, %v765
        %767 = vst [vmem:[%s746 + $0x10] sm:$0xf] %v766
        %v768 = vld [vmem:[%s746 + $0x14] sm:$0x1]
        %v769 = vsel %vm755, %v689, %v768
        %770 = vst [vmem:[%s746 + $0x14] sm:$0x1] %v769
        %v771 = vld [vmem:[%s746 + $0x18] sm:$0xf]
        %v772 = vsel %vm749, %v696, %v771
        %773 = vst [vmem:[%s746 + $0x18] sm:$0xf] %v772
        %v774 = vld [vmem:[%s746 + $0x1c] sm:$0x1]
        %v775 = vsel %vm755, %v697, %v774
        %776 = vst [vmem:[%s746 + $0x1c] sm:$0x1] %v775
        %v777 = vld [vmem:[%s746 + $0x20] sm:$0xf]
        %v778 = vsel %vm749, %v704, %v777
        %779 = vst [vmem:[%s746 + $0x20] sm:$0xf] %v778
        %v780 = vld [vmem:[%s746 + $0x24] sm:$0x1]
        %v781 = vsel %vm755, %v705, %v780
        %782 = vst [vmem:[%s746 + $0x24] sm:$0x1] %v781
        %v783 = vld [vmem:[%s746 + $0x28] sm:$0xf]
        %v784 = vsel %vm749, %v712, %v783
        %785 = vst [vmem:[%s746 + $0x28] sm:$0xf] %v784
        %v786 = vld [vmem:[%s746 + $0x2c] sm:$0x1]
        %v787 = vsel %vm755, %v713, %v786
        %788 = vst [vmem:[%s746 + $0x2c] sm:$0x1] %v787
        %v789 = vld [vmem:[%s746 + $0x30] sm:$0xf]
        %v790 = vsel %vm749, %v720, %v789
        %791 = vst [vmem:[%s746 + $0x30] sm:$0xf] %v790
        %v792 = vld [vmem:[%s746 + $0x34] sm:$0x1]
        %v793 = vsel %vm755, %v721, %v792
        %794 = vst [vmem:[%s746 + $0x34] sm:$0x1] %v793
        %v795 = vld [vmem:[%s746 + $0x38] sm:$0xf]
        %v796 = vsel %vm749, %v728, %v795
        %797 = vst [vmem:[%s746 + $0x38] sm:$0xf] %v796
        %v798 = vld [vmem:[%s746 + $0x3c] sm:$0x1]
        %v799 = vsel %vm755, %v729, %v798
        %800 = vst [vmem:[%s746 + $0x3c] sm:$0x1] %v799
        %v801 = vld [vmem:[#allocation2] sm:$0xf]
        %v802 = vld [vmem:[#allocation2 + $0x8] sm:$0xf]
        %v803 = vld [vmem:[#allocation2 + $0x10] sm:$0xf]
        %v804 = vld [vmem:[#allocation2 + $0x18] sm:$0xf]
        %v805 = vld [vmem:[#allocation2 + $0x20] sm:$0xf]
        %v806 = vld [vmem:[#allocation2 + $0x28] sm:$0xf]
        %v807 = vld [vmem:[#allocation2 + $0x30] sm:$0xf]
        %v808 = vld [vmem:[#allocation2 + $0x38] sm:$0xf]
        %v809 = vld [vmem:[#allocation2 + $0x4] sm:$0x1]
        %v810 = vld [vmem:[#allocation2 + $0xc] sm:$0x1]
        %v811 = vld [vmem:[#allocation2 + $0x14] sm:$0x1]
        %v812 = vld [vmem:[#allocation2 + $0x1c] sm:$0x1]
        %v813 = vld [vmem:[#allocation2 + $0x24] sm:$0x1]
        %v814 = vld [vmem:[#allocation2 + $0x2c] sm:$0x1]
        %v815 = vld [vmem:[#allocation2 + $0x34] sm:$0x1]
        %v816 = vld [vmem:[#allocation2 + $0x3c] sm:$0x1]
        %vm817 = vsmask.f32 3328
        %vm818 = vsmask.f32 7440
        %vm819 = vmor %vm817, %vm818
        %v821 = vshrl.u32 %v801, 16
        %v823 = vrot.slane %v821, 4
        %v824 = vshll.u32 %v801, 16
        %v826 = vrot.slane %v824, 5
        %v827 = vor.u32 %v823, %v826
        %v828 = vrot.slane %v827, 4
        %v830 = vshll.u32 %v809, 16
        %v832 = vrot.slane %v830, 5
        %v833 = vsel %vm819, %v828, %v832
        %v835 = vshrl.u32 %v802, 16
        %v837 = vrot.slane %v835, 4
        %v838 = vshll.u32 %v802, 16
        %v840 = vrot.slane %v838, 5
        %v841 = vor.u32 %v837, %v840
        %v842 = vrot.slane %v841, 4
        %v844 = vshll.u32 %v810, 16
        %v846 = vrot.slane %v844, 5
        %v847 = vsel %vm819, %v842, %v846
        %v849 = vshrl.u32 %v803, 16
        %v851 = vrot.slane %v849, 4
        %v852 = vshll.u32 %v803, 16
        %v854 = vrot.slane %v852, 5
        %v855 = vor.u32 %v851, %v854
        %v856 = vrot.slane %v855, 4
        %v858 = vshll.u32 %v811, 16
        %v860 = vrot.slane %v858, 5
        %v861 = vsel %vm819, %v856, %v860
        %v863 = vshrl.u32 %v804, 16
        %v865 = vrot.slane %v863, 4
        %v866 = vshll.u32 %v804, 16
        %v868 = vrot.slane %v866, 5
        %v869 = vor.u32 %v865, %v868
        %v870 = vrot.slane %v869, 4
        %v872 = vshll.u32 %v812, 16
        %v874 = vrot.slane %v872, 5
        %v875 = vsel %vm819, %v870, %v874
        %v877 = vshrl.u32 %v805, 16
        %v879 = vrot.slane %v877, 4
        %v880 = vshll.u32 %v805, 16
        %v882 = vrot.slane %v880, 5
        %v883 = vor.u32 %v879, %v882
        %v884 = vrot.slane %v883, 4
        %v886 = vshll.u32 %v813, 16
        %v888 = vrot.slane %v886, 5
        %v889 = vsel %vm819, %v884, %v888
        %v891 = vshrl.u32 %v806, 16
        %v893 = vrot.slane %v891, 4
        %v894 = vshll.u32 %v806, 16
        %v896 = vrot.slane %v894, 5
        %v897 = vor.u32 %v893, %v896
        %v898 = vrot.slane %v897, 4
        %v900 = vshll.u32 %v814, 16
        %v902 = vrot.slane %v900, 5
        %v903 = vsel %vm819, %v898, %v902
        %v905 = vshrl.u32 %v807, 16
        %v907 = vrot.slane %v905, 4
        %v908 = vshll.u32 %v807, 16
        %v910 = vrot.slane %v908, 5
        %v911 = vor.u32 %v907, %v910
        %v912 = vrot.slane %v911, 4
        %v914 = vshll.u32 %v815, 16
        %v916 = vrot.slane %v914, 5
        %v917 = vsel %vm819, %v912, %v916
        %v919 = vshrl.u32 %v808, 16
        %v921 = vrot.slane %v919, 4
        %v922 = vshll.u32 %v808, 16
        %v924 = vrot.slane %v922, 5
        %v925 = vor.u32 %v921, %v924
        %v926 = vrot.slane %v925, 4
        %v928 = vshll.u32 %v816, 16
        %v930 = vrot.slane %v928, 5
        %v931 = vsel %vm819, %v926, %v930
        %v932 = vld [vmem:[#allocation2] sm:$0xe]
        %v933 = vld [vmem:[#allocation2 + $0x8] sm:$0xe]
        %v934 = vld [vmem:[#allocation2 + $0x10] sm:$0xe]
        %v935 = vld [vmem:[#allocation2 + $0x18] sm:$0xe]
        %v936 = vld [vmem:[#allocation2 + $0x20] sm:$0xe]
        %v937 = vld [vmem:[#allocation2 + $0x28] sm:$0xe]
        %v938 = vld [vmem:[#allocation2 + $0x30] sm:$0xe]
        %v939 = vld [vmem:[#allocation2 + $0x38] sm:$0xe]
        %vm956 = vcmask 1042432
        %vm957 = vcmask 1046532
        %vm958 = vmor %vm956, %vm957
        %v959 = vrot.slane %v932, 5
        %v960 = vrot.slane %v959, 4
        %v961 = vrot.slane %v809, 5
        %v962 = vsel %vm958, %v960, %v961
        %v963 = vrot.slane %v933, 5
        %v964 = vrot.slane %v963, 4
        %v965 = vrot.slane %v810, 5
        %v966 = vsel %vm958, %v964, %v965
        %v967 = vrot.slane %v934, 5
        %v968 = vrot.slane %v967, 4
        %v969 = vrot.slane %v811, 5
        %v970 = vsel %vm958, %v968, %v969
        %v971 = vrot.slane %v935, 5
        %v972 = vrot.slane %v971, 4
        %v973 = vrot.slane %v812, 5
        %v974 = vsel %vm958, %v972, %v973
        %v975 = vrot.slane %v936, 5
        %v976 = vrot.slane %v975, 4
        %v977 = vrot.slane %v813, 5
        %v978 = vsel %vm958, %v976, %v977
        %v979 = vrot.slane %v937, 5
        %v980 = vrot.slane %v979, 4
        %v981 = vrot.slane %v814, 5
        %v982 = vsel %vm958, %v980, %v981
        %v983 = vrot.slane %v938, 5
        %v984 = vrot.slane %v983, 4
        %v985 = vrot.slane %v815, 5
        %v986 = vsel %vm958, %v984, %v985
        %v987 = vrot.slane %v939, 5
        %v988 = vrot.slane %v987, 4
        %v989 = vrot.slane %v816, 5
        %v990 = vsel %vm958, %v988, %v989
        %v991 = vld [vmem:[%s746] sm:$0xf]
        %v992 = vld [vmem:[%s746 + $0x8] sm:$0xf]
        %v993 = vld [vmem:[%s746 + $0x10] sm:$0xf]
        %v994 = vld [vmem:[%s746 + $0x18] sm:$0xf]
        %v995 = vld [vmem:[%s746 + $0x20] sm:$0xf]
        %v996 = vld [vmem:[%s746 + $0x28] sm:$0xf]
        %v997 = vld [vmem:[%s746 + $0x30] sm:$0xf]
        %v998 = vld [vmem:[%s746 + $0x38] sm:$0xf]
        %v999 = vld [vmem:[%s746 + $0x4] sm:$0x1]
        %v1000 = vld [vmem:[%s746 + $0xc] sm:$0x1]
        %v1001 = vld [vmem:[%s746 + $0x14] sm:$0x1]
        %v1002 = vld [vmem:[%s746 + $0x1c] sm:$0x1]
        %v1003 = vld [vmem:[%s746 + $0x24] sm:$0x1]
        %v1004 = vld [vmem:[%s746 + $0x2c] sm:$0x1]
        %v1005 = vld [vmem:[%s746 + $0x34] sm:$0x1]
        %v1006 = vld [vmem:[%s746 + $0x3c] sm:$0x1]
        %v1008 = vshrl.u32 %v991, 16
        %v1010 = vrot.slane %v1008, 4
        %v1011 = vshll.u32 %v991, 16
        %v1013 = vrot.slane %v1011, 5
        %v1014 = vor.u32 %v1010, %v1013
        %v1015 = vrot.slane %v1014, 4
        %v1017 = vshll.u32 %v999, 16
        %v1019 = vrot.slane %v1017, 5
        %v1020 = vsel %vm819, %v1015, %v1019
        %v1022 = vshrl.u32 %v992, 16
        %v1024 = vrot.slane %v1022, 4
        %v1025 = vshll.u32 %v992, 16
        %v1027 = vrot.slane %v1025, 5
        %v1028 = vor.u32 %v1024, %v1027
        %v1029 = vrot.slane %v1028, 4
        %v1031 = vshll.u32 %v1000, 16
        %v1033 = vrot.slane %v1031, 5
        %v1034 = vsel %vm819, %v1029, %v1033
        %v1036 = vshrl.u32 %v993, 16
        %v1038 = vrot.slane %v1036, 4
        %v1039 = vshll.u32 %v993, 16
        %v1041 = vrot.slane %v1039, 5
        %v1042 = vor.u32 %v1038, %v1041
        %v1043 = vrot.slane %v1042, 4
        %v1045 = vshll.u32 %v1001, 16
        %v1047 = vrot.slane %v1045, 5
        %v1048 = vsel %vm819, %v1043, %v1047
        %v1050 = vshrl.u32 %v994, 16
        %v1052 = vrot.slane %v1050, 4
        %v1053 = vshll.u32 %v994, 16
        %v1055 = vrot.slane %v1053, 5
        %v1056 = vor.u32 %v1052, %v1055
        %v1057 = vrot.slane %v1056, 4
        %v1059 = vshll.u32 %v1002, 16
        %v1061 = vrot.slane %v1059, 5
        %v1062 = vsel %vm819, %v1057, %v1061
        %v1064 = vshrl.u32 %v995, 16
        %v1066 = vrot.slane %v1064, 4
        %v1067 = vshll.u32 %v995, 16
        %v1069 = vrot.slane %v1067, 5
        %v1070 = vor.u32 %v1066, %v1069
        %v1071 = vrot.slane %v1070, 4
        %v1073 = vshll.u32 %v1003, 16
        %v1075 = vrot.slane %v1073, 5
        %v1076 = vsel %vm819, %v1071, %v1075
        %v1078 = vshrl.u32 %v996, 16
        %v1080 = vrot.slane %v1078, 4
        %v1081 = vshll.u32 %v996, 16
        %v1083 = vrot.slane %v1081, 5
        %v1084 = vor.u32 %v1080, %v1083
        %v1085 = vrot.slane %v1084, 4
        %v1087 = vshll.u32 %v1004, 16
        %v1089 = vrot.slane %v1087, 5
        %v1090 = vsel %vm819, %v1085, %v1089
        %v1092 = vshrl.u32 %v997, 16
        %v1094 = vrot.slane %v1092, 4
        %v1095 = vshll.u32 %v997, 16
        %v1097 = vrot.slane %v1095, 5
        %v1098 = vor.u32 %v1094, %v1097
        %v1099 = vrot.slane %v1098, 4
        %v1101 = vshll.u32 %v1005, 16
        %v1103 = vrot.slane %v1101, 5
        %v1104 = vsel %vm819, %v1099, %v1103
        %v1106 = vshrl.u32 %v998, 16
        %v1108 = vrot.slane %v1106, 4
        %v1109 = vshll.u32 %v998, 16
        %v1111 = vrot.slane %v1109, 5
        %v1112 = vor.u32 %v1108, %v1111
        %v1113 = vrot.slane %v1112, 4
        %v1115 = vshll.u32 %v1006, 16
        %v1117 = vrot.slane %v1115, 5
        %v1118 = vsel %vm819, %v1113, %v1117
        %v1119 = vld [vmem:[%s746] sm:$0xe]
        %v1120 = vld [vmem:[%s746 + $0x8] sm:$0xe]
        %v1121 = vld [vmem:[%s746 + $0x10] sm:$0xe]
        %v1122 = vld [vmem:[%s746 + $0x18] sm:$0xe]
        %v1123 = vld [vmem:[%s746 + $0x20] sm:$0xe]
        %v1124 = vld [vmem:[%s746 + $0x28] sm:$0xe]
        %v1125 = vld [vmem:[%s746 + $0x30] sm:$0xe]
        %v1126 = vld [vmem:[%s746 + $0x38] sm:$0xe]
        %v1143 = vrot.slane %v1119, 5
        %v1144 = vrot.slane %v1143, 4
        %v1145 = vrot.slane %v999, 5
        %v1146 = vsel %vm958, %v1144, %v1145
        %v1147 = vrot.slane %v1120, 5
        %v1148 = vrot.slane %v1147, 4
        %v1149 = vrot.slane %v1000, 5
        %v1150 = vsel %vm958, %v1148, %v1149
        %v1151 = vrot.slane %v1121, 5
        %v1152 = vrot.slane %v1151, 4
        %v1153 = vrot.slane %v1001, 5
        %v1154 = vsel %vm958, %v1152, %v1153
        %v1155 = vrot.slane %v1122, 5
        %v1156 = vrot.slane %v1155, 4
        %v1157 = vrot.slane %v1002, 5
        %v1158 = vsel %vm958, %v1156, %v1157
        %v1159 = vrot.slane %v1123, 5
        %v1160 = vrot.slane %v1159, 4
        %v1161 = vrot.slane %v1003, 5
        %v1162 = vsel %vm958, %v1160, %v1161
        %v1163 = vrot.slane %v1124, 5
        %v1164 = vrot.slane %v1163, 4
        %v1165 = vrot.slane %v1004, 5
        %v1166 = vsel %vm958, %v1164, %v1165
        %v1167 = vrot.slane %v1125, 5
        %v1168 = vrot.slane %v1167, 4
        %v1169 = vrot.slane %v1005, 5
        %v1170 = vsel %vm958, %v1168, %v1169
        %v1171 = vrot.slane %v1126, 5
        %v1172 = vrot.slane %v1171, 4
        %v1173 = vrot.slane %v1006, 5
        %v1174 = vsel %vm958, %v1172, %v1173
        %s1175 = scalar_lea.vmem [#allocation2], 16
        %v1176 = vld [vmem:[%s1175] sm:$0xf]
        %v1177 = vld [vmem:[%s1175 + $0x8] sm:$0xf]
        %v1178 = vld [vmem:[%s1175 + $0x10] sm:$0xf]
        %v1179 = vld [vmem:[%s1175 + $0x18] sm:$0xf]
        %v1180 = vld [vmem:[%s1175 + $0x20] sm:$0xf]
        %v1181 = vld [vmem:[%s1175 + $0x28] sm:$0xf]
        %v1182 = vld [vmem:[%s1175 + $0x30] sm:$0xf]
        %v1183 = vld [vmem:[%s1175 + $0x38] sm:$0xf]
        %v1184 = vld [vmem:[%s1175 + $0x4] sm:$0x1]
        %v1185 = vld [vmem:[%s1175 + $0xc] sm:$0x1]
        %v1186 = vld [vmem:[%s1175 + $0x14] sm:$0x1]
        %v1187 = vld [vmem:[%s1175 + $0x1c] sm:$0x1]
        %v1188 = vld [vmem:[%s1175 + $0x24] sm:$0x1]
        %v1189 = vld [vmem:[%s1175 + $0x2c] sm:$0x1]
        %v1190 = vld [vmem:[%s1175 + $0x34] sm:$0x1]
        %v1191 = vld [vmem:[%s1175 + $0x3c] sm:$0x1]
        %v1193 = vshrl.u32 %v1176, 16
        %v1195 = vrot.slane %v1193, 4
        %v1196 = vshll.u32 %v1176, 16
        %v1198 = vrot.slane %v1196, 5
        %v1199 = vor.u32 %v1195, %v1198
        %v1200 = vrot.slane %v1199, 4
        %v1202 = vshll.u32 %v1184, 16
        %v1204 = vrot.slane %v1202, 5
        %v1205 = vsel %vm819, %v1200, %v1204
        %v1207 = vshrl.u32 %v1177, 16
        %v1209 = vrot.slane %v1207, 4
        %v1210 = vshll.u32 %v1177, 16
        %v1212 = vrot.slane %v1210, 5
        %v1213 = vor.u32 %v1209, %v1212
        %v1214 = vrot.slane %v1213, 4
        %v1216 = vshll.u32 %v1185, 16
        %v1218 = vrot.slane %v1216, 5
        %v1219 = vsel %vm819, %v1214, %v1218
        %v1221 = vshrl.u32 %v1178, 16
        %v1223 = vrot.slane %v1221, 4
        %v1224 = vshll.u32 %v1178, 16
        %v1226 = vrot.slane %v1224, 5
        %v1227 = vor.u32 %v1223, %v1226
        %v1228 = vrot.slane %v1227, 4
        %v1230 = vshll.u32 %v1186, 16
        %v1232 = vrot.slane %v1230, 5
        %v1233 = vsel %vm819, %v1228, %v1232
        %v1235 = vshrl.u32 %v1179, 16
        %v1237 = vrot.slane %v1235, 4
        %v1238 = vshll.u32 %v1179, 16
        %v1240 = vrot.slane %v1238, 5
        %v1241 = vor.u32 %v1237, %v1240
        %v1242 = vrot.slane %v1241, 4
        %v1244 = vshll.u32 %v1187, 16
        %v1246 = vrot.slane %v1244, 5
        %v1247 = vsel %vm819, %v1242, %v1246
        %v1249 = vshrl.u32 %v1180, 16
        %v1251 = vrot.slane %v1249, 4
        %v1252 = vshll.u32 %v1180, 16
        %v1254 = vrot.slane %v1252, 5
        %v1255 = vor.u32 %v1251, %v1254
        %v1256 = vrot.slane %v1255, 4
        %v1258 = vshll.u32 %v1188, 16
        %v1260 = vrot.slane %v1258, 5
        %v1261 = vsel %vm819, %v1256, %v1260
        %v1263 = vshrl.u32 %v1181, 16
        %v1265 = vrot.slane %v1263, 4
        %v1266 = vshll.u32 %v1181, 16
        %v1268 = vrot.slane %v1266, 5
        %v1269 = vor.u32 %v1265, %v1268
        %v1270 = vrot.slane %v1269, 4
        %v1272 = vshll.u32 %v1189, 16
        %v1274 = vrot.slane %v1272, 5
        %v1275 = vsel %vm819, %v1270, %v1274
        %v1277 = vshrl.u32 %v1182, 16
        %v1279 = vrot.slane %v1277, 4
        %v1280 = vshll.u32 %v1182, 16
        %v1282 = vrot.slane %v1280, 5
        %v1283 = vor.u32 %v1279, %v1282
        %v1284 = vrot.slane %v1283, 4
        %v1286 = vshll.u32 %v1190, 16
        %v1288 = vrot.slane %v1286, 5
        %v1289 = vsel %vm819, %v1284, %v1288
        %v1291 = vshrl.u32 %v1183, 16
        %v1293 = vrot.slane %v1291, 4
        %v1294 = vshll.u32 %v1183, 16
        %v1296 = vrot.slane %v1294, 5
        %v1297 = vor.u32 %v1293, %v1296
        %v1298 = vrot.slane %v1297, 4
        %v1300 = vshll.u32 %v1191, 16
        %v1302 = vrot.slane %v1300, 5
        %v1303 = vsel %vm819, %v1298, %v1302
        %v1304 = vld [vmem:[%s1175] sm:$0xe]
        %v1305 = vld [vmem:[%s1175 + $0x8] sm:$0xe]
        %v1306 = vld [vmem:[%s1175 + $0x10] sm:$0xe]
        %v1307 = vld [vmem:[%s1175 + $0x18] sm:$0xe]
        %v1308 = vld [vmem:[%s1175 + $0x20] sm:$0xe]
        %v1309 = vld [vmem:[%s1175 + $0x28] sm:$0xe]
        %v1310 = vld [vmem:[%s1175 + $0x30] sm:$0xe]
        %v1311 = vld [vmem:[%s1175 + $0x38] sm:$0xe]
        %v1328 = vrot.slane %v1304, 5
        %v1329 = vrot.slane %v1328, 4
        %v1330 = vrot.slane %v1184, 5
        %v1331 = vsel %vm958, %v1329, %v1330
        %v1332 = vrot.slane %v1305, 5
        %v1333 = vrot.slane %v1332, 4
        %v1334 = vrot.slane %v1185, 5
        %v1335 = vsel %vm958, %v1333, %v1334
        %v1336 = vrot.slane %v1306, 5
        %v1337 = vrot.slane %v1336, 4
        %v1338 = vrot.slane %v1186, 5
        %v1339 = vsel %vm958, %v1337, %v1338
        %v1340 = vrot.slane %v1307, 5
        %v1341 = vrot.slane %v1340, 4
        %v1342 = vrot.slane %v1187, 5
        %v1343 = vsel %vm958, %v1341, %v1342
        %v1344 = vrot.slane %v1308, 5
        %v1345 = vrot.slane %v1344, 4
        %v1346 = vrot.slane %v1188, 5
        %v1347 = vsel %vm958, %v1345, %v1346
        %v1348 = vrot.slane %v1309, 5
        %v1349 = vrot.slane %v1348, 4
        %v1350 = vrot.slane %v1189, 5
        %v1351 = vsel %vm958, %v1349, %v1350
        %v1352 = vrot.slane %v1310, 5
        %v1353 = vrot.slane %v1352, 4
        %v1354 = vrot.slane %v1190, 5
        %v1355 = vsel %vm958, %v1353, %v1354
        %v1356 = vrot.slane %v1311, 5
        %v1357 = vrot.slane %v1356, 4
        %v1358 = vrot.slane %v1191, 5
        %v1359 = vsel %vm958, %v1357, %v1358
        %v1368 = vunpack.c.l.b16 %v801
        %v1369 = vunpack.c.l.b16 %v802
        %v1370 = vunpack.c.l.b16 %v803
        %v1371 = vunpack.c.l.b16 %v804
        %v1372 = vunpack.c.l.b16 %v805
        %v1373 = vunpack.c.l.b16 %v806
        %v1374 = vunpack.c.l.b16 %v807
        %v1375 = vunpack.c.l.b16 %v808
        %v1376 = vpack.c.b16 %v1369, %v1368
        %v1377 = vpack.c.b16 %v1371, %v1370
        %v1378 = vpack.c.b16 %v1373, %v1372
        %v1379 = vpack.c.b16 %v1375, %v1374
        %v1384 = vunpack.c.l.b16 %v833
        %v1385 = vunpack.c.l.b16 %v847
        %v1386 = vunpack.c.l.b16 %v861
        %v1387 = vunpack.c.l.b16 %v875
        %v1388 = vunpack.c.l.b16 %v889
        %v1389 = vunpack.c.l.b16 %v903
        %v1390 = vunpack.c.l.b16 %v917
        %v1391 = vunpack.c.l.b16 %v931
        %v1392 = vpack.c.b16 %v1385, %v1384
        %v1393 = vpack.c.b16 %v1387, %v1386
        %v1394 = vpack.c.b16 %v1389, %v1388
        %v1395 = vpack.c.b16 %v1391, %v1390
        %v1400 = vunpack.c.l.b16 %v962
        %v1401 = vunpack.c.l.b16 %v966
        %v1402 = vunpack.c.l.b16 %v970
        %v1403 = vunpack.c.l.b16 %v974
        %v1404 = vunpack.c.l.b16 %v978
        %v1405 = vunpack.c.l.b16 %v982
        %v1406 = vunpack.c.l.b16 %v986
        %v1407 = vunpack.c.l.b16 %v990
        %v1408 = vpack.c.b16 %v1401, %v1400
        %v1409 = vpack.c.b16 %v1403, %v1402
        %v1410 = vpack.c.b16 %v1405, %v1404
        %v1411 = vpack.c.b16 %v1407, %v1406
        %v1424 = vunpack.c.l.b16 %v991
        %v1425 = vunpack.c.l.b16 %v992
        %v1426 = vunpack.c.l.b16 %v993
        %v1427 = vunpack.c.l.b16 %v994
        %v1428 = vunpack.c.l.b16 %v995
        %v1429 = vunpack.c.l.b16 %v996
        %v1430 = vunpack.c.l.b16 %v997
        %v1431 = vunpack.c.l.b16 %v998
        %v1432 = vpack.c.b16 %v1425, %v1424
        %v1433 = vpack.c.b16 %v1427, %v1426
        %v1434 = vpack.c.b16 %v1429, %v1428
        %v1435 = vpack.c.b16 %v1431, %v1430
        %v1440 = vunpack.c.l.b16 %v1020
        %v1441 = vunpack.c.l.b16 %v1034
        %v1442 = vunpack.c.l.b16 %v1048
        %v1443 = vunpack.c.l.b16 %v1062
        %v1444 = vunpack.c.l.b16 %v1076
        %v1445 = vunpack.c.l.b16 %v1090
        %v1446 = vunpack.c.l.b16 %v1104
        %v1447 = vunpack.c.l.b16 %v1118
        %v1448 = vpack.c.b16 %v1441, %v1440
        %v1449 = vpack.c.b16 %v1443, %v1442
        %v1450 = vpack.c.b16 %v1445, %v1444
        %v1451 = vpack.c.b16 %v1447, %v1446
        %v1456 = vunpack.c.l.b16 %v1146
        %v1457 = vunpack.c.l.b16 %v1150
        %v1458 = vunpack.c.l.b16 %v1154
        %v1459 = vunpack.c.l.b16 %v1158
        %v1460 = vunpack.c.l.b16 %v1162
        %v1461 = vunpack.c.l.b16 %v1166
        %v1462 = vunpack.c.l.b16 %v1170
        %v1463 = vunpack.c.l.b16 %v1174
        %v1464 = vpack.c.b16 %v1457, %v1456
        %v1465 = vpack.c.b16 %v1459, %v1458
        %v1466 = vpack.c.b16 %v1461, %v1460
        %v1467 = vpack.c.b16 %v1463, %v1462
        %v1480 = vunpack.c.l.b16 %v1176
        %v1481 = vunpack.c.l.b16 %v1177
        %v1482 = vunpack.c.l.b16 %v1178
        %v1483 = vunpack.c.l.b16 %v1179
        %v1484 = vunpack.c.l.b16 %v1180
        %v1485 = vunpack.c.l.b16 %v1181
        %v1486 = vunpack.c.l.b16 %v1182
        %v1487 = vunpack.c.l.b16 %v1183
        %v1488 = vpack.c.b16 %v1481, %v1480
        %v1489 = vpack.c.b16 %v1483, %v1482
        %v1490 = vpack.c.b16 %v1485, %v1484
        %v1491 = vpack.c.b16 %v1487, %v1486
        %v1496 = vunpack.c.l.b16 %v1205
        %v1497 = vunpack.c.l.b16 %v1219
        %v1498 = vunpack.c.l.b16 %v1233
        %v1499 = vunpack.c.l.b16 %v1247
        %v1500 = vunpack.c.l.b16 %v1261
        %v1501 = vunpack.c.l.b16 %v1275
        %v1502 = vunpack.c.l.b16 %v1289
        %v1503 = vunpack.c.l.b16 %v1303
        %v1504 = vpack.c.b16 %v1497, %v1496
        %v1505 = vpack.c.b16 %v1499, %v1498
        %v1506 = vpack.c.b16 %v1501, %v1500
        %v1507 = vpack.c.b16 %v1503, %v1502
        %v1512 = vunpack.c.l.b16 %v1331
        %v1513 = vunpack.c.l.b16 %v1335
        %v1514 = vunpack.c.l.b16 %v1339
        %v1515 = vunpack.c.l.b16 %v1343
        %v1516 = vunpack.c.l.b16 %v1347
        %v1517 = vunpack.c.l.b16 %v1351
        %v1518 = vunpack.c.l.b16 %v1355
        %v1519 = vunpack.c.l.b16 %v1359
        %v1520 = vpack.c.b16 %v1513, %v1512
        %v1521 = vpack.c.b16 %v1515, %v1514
        %v1522 = vpack.c.b16 %v1517, %v1516
        %v1523 = vpack.c.b16 %v1519, %v1518
        %v1528 = vld [vmem:[#allocation8] sm:$0xf]
        %v1529 = vld [vmem:[#allocation8 + $0x4] sm:$0xf]
        %v1530 = vld [vmem:[#allocation8 + $0x8] sm:$0xf]
        %v1531 = vld [vmem:[#allocation8 + $0xc] sm:$0xf]
        %v1532 = vld [vmem:[#allocation8 + $0x10] sm:$0xf]
        %v1533 = vld [vmem:[#allocation8 + $0x14] sm:$0xf]
        %v1534 = vld [vmem:[#allocation8 + $0x18] sm:$0xf]
        %v1535 = vld [vmem:[#allocation8 + $0x1c] sm:$0xf]
        %v1536 = vld [vmem:[#allocation8 + $0x20] sm:$0xf]
        %v1537 = vld [vmem:[#allocation8 + $0x24] sm:$0xf]
        %v1538 = vld [vmem:[#allocation8 + $0x28] sm:$0xf]
        %v1539 = vld [vmem:[#allocation8 + $0x2c] sm:$0xf]
        %v1540 = vld [vmem:[#allocation8 + $0x30] sm:$0xf]
        %v1541 = vld [vmem:[#allocation8 + $0x34] sm:$0xf]
        %v1542 = vld [vmem:[#allocation8 + $0x38] sm:$0xf]
        %v1543 = vld [vmem:[#allocation8 + $0x3c] sm:$0xf]
        %v1544 = vld [vmem:[#allocation8 + $0x40] sm:$0xf]
        %v1545 = vld [vmem:[#allocation8 + $0x44] sm:$0xf]
        %v1546 = vld [vmem:[#allocation8 + $0x48] sm:$0xf]
        %v1547 = vld [vmem:[#allocation8 + $0x4c] sm:$0xf]
        %v1548 = vld [vmem:[#allocation8 + $0x50] sm:$0xf]
        %v1549 = vld [vmem:[#allocation8 + $0x54] sm:$0xf]
        %v1550 = vld [vmem:[#allocation8 + $0x58] sm:$0xf]
        %v1551 = vld [vmem:[#allocation8 + $0x5c] sm:$0xf]
        %v1552 = vld [vmem:[#allocation8 + $0x60] sm:$0xf]
        %v1553 = vld [vmem:[#allocation8 + $0x64] sm:$0xf]
        %v1554 = vld [vmem:[#allocation8 + $0x68] sm:$0xf]
        %v1555 = vld [vmem:[#allocation8 + $0x6c] sm:$0xf]
        %v1556 = vld [vmem:[#allocation8 + $0x70] sm:$0xf]
        %v1557 = vld [vmem:[#allocation8 + $0x74] sm:$0xf]
        %v1558 = vld [vmem:[#allocation8 + $0x78] sm:$0xf]
        %v1559 = vld [vmem:[#allocation8 + $0x7c] sm:$0xf]
        %v1560 = vld [vmem:[#allocation8 + $0x80] sm:$0xf]
        %v1561 = vld [vmem:[#allocation8 + $0x84] sm:$0xf]
        %v1562 = vld [vmem:[#allocation8 + $0x88] sm:$0xf]
        %v1563 = vld [vmem:[#allocation8 + $0x8c] sm:$0xf]
        %v1564 = vld [vmem:[#allocation8 + $0x90] sm:$0xf]
        %v1565 = vld [vmem:[#allocation8 + $0x94] sm:$0xf]
        %v1566 = vld [vmem:[#allocation8 + $0x98] sm:$0xf]
        %v1567 = vld [vmem:[#allocation8 + $0x9c] sm:$0xf]
        %v1568 = vld [vmem:[#allocation8 + $0xa0] sm:$0xf]
        %v1569 = vld [vmem:[#allocation8 + $0xa4] sm:$0xf]
        %v1570 = vld [vmem:[#allocation8 + $0xa8] sm:$0xf]
        %v1571 = vld [vmem:[#allocation8 + $0xac] sm:$0xf]
        %v1572 = vld [vmem:[#allocation8 + $0xb0] sm:$0xf]
        %v1573 = vld [vmem:[#allocation8 + $0xb4] sm:$0xf]
        %v1574 = vld [vmem:[#allocation8 + $0xb8] sm:$0xf]
        %v1575 = vld [vmem:[#allocation8 + $0xbc] sm:$0xf]
        %v1576 = vld [vmem:[#allocation8 + $0xc0] sm:$0xf]
        %v1577 = vld [vmem:[#allocation8 + $0xc4] sm:$0xf]
        %v1578 = vld [vmem:[#allocation8 + $0xc8] sm:$0xf]
        %v1579 = vld [vmem:[#allocation8 + $0xcc] sm:$0xf]
        %v1580 = vld [vmem:[#allocation8 + $0xd0] sm:$0xf]
        %v1581 = vld [vmem:[#allocation8 + $0xd4] sm:$0xf]
        %v1582 = vld [vmem:[#allocation8 + $0xd8] sm:$0xf]
        %v1583 = vld [vmem:[#allocation8 + $0xdc] sm:$0xf]
        %v1584 = vld [vmem:[#allocation8 + $0xe0] sm:$0xf]
        %v1585 = vld [vmem:[#allocation8 + $0xe4] sm:$0xf]
        %v1586 = vld [vmem:[#allocation8 + $0xe8] sm:$0xf]
        %v1587 = vld [vmem:[#allocation8 + $0xec] sm:$0xf]
        %v1588 = vld [vmem:[#allocation8 + $0xf0] sm:$0xf]
        %v1589 = vld [vmem:[#allocation8 + $0xf4] sm:$0xf]
        %v1590 = vld [vmem:[#allocation8 + $0xf8] sm:$0xf]
        %v1591 = vld [vmem:[#allocation8 + $0xfc] sm:$0xf]
        %v1592 = vld [vmem:[#allocation8 + $0x100] sm:$0xf]
        %v1593 = vld [vmem:[#allocation8 + $0x104] sm:$0xf]
        %v1594 = vld [vmem:[#allocation8 + $0x108] sm:$0xf]
        %v1595 = vld [vmem:[#allocation8 + $0x10c] sm:$0xf]
        %v1596 = vld [vmem:[#allocation8 + $0x110] sm:$0xf]
        %v1597 = vld [vmem:[#allocation8 + $0x114] sm:$0xf]
        %v1598 = vld [vmem:[#allocation8 + $0x118] sm:$0xf]
        %v1599 = vld [vmem:[#allocation8 + $0x11c] sm:$0xf]
        %v1600 = vld [vmem:[#allocation8 + $0x120] sm:$0xf]
        %v1601 = vld [vmem:[#allocation8 + $0x124] sm:$0xf]
        %v1602 = vld [vmem:[#allocation8 + $0x128] sm:$0xf]
        %v1603 = vld [vmem:[#allocation8 + $0x12c] sm:$0xf]
        %v1604 = vld [vmem:[#allocation8 + $0x130] sm:$0xf]
        %v1605 = vld [vmem:[#allocation8 + $0x134] sm:$0xf]
        %v1606 = vld [vmem:[#allocation8 + $0x138] sm:$0xf]
        %v1607 = vld [vmem:[#allocation8 + $0x13c] sm:$0xf]
        %v1608 = vld [vmem:[#allocation8 + $0x140] sm:$0xf]
        %v1609 = vld [vmem:[#allocation8 + $0x144] sm:$0xf]
        %v1610 = vld [vmem:[#allocation8 + $0x148] sm:$0xf]
        %v1611 = vld [vmem:[#allocation8 + $0x14c] sm:$0xf]
        %v1612 = vld [vmem:[#allocation8 + $0x150] sm:$0xf]
        %v1613 = vld [vmem:[#allocation8 + $0x154] sm:$0xf]
        %v1614 = vld [vmem:[#allocation8 + $0x158] sm:$0xf]
        %v1615 = vld [vmem:[#allocation8 + $0x15c] sm:$0xf]
        %v1616 = vld [vmem:[#allocation8 + $0x160] sm:$0xf]
        %v1617 = vld [vmem:[#allocation8 + $0x164] sm:$0xf]
        %v1618 = vld [vmem:[#allocation8 + $0x168] sm:$0xf]
        %v1619 = vld [vmem:[#allocation8 + $0x16c] sm:$0xf]
        %v1620 = vld [vmem:[#allocation8 + $0x170] sm:$0xf]
        %v1621 = vld [vmem:[#allocation8 + $0x174] sm:$0xf]
        %v1622 = vld [vmem:[#allocation8 + $0x178] sm:$0xf]
        %v1623 = vld [vmem:[#allocation8 + $0x17c] sm:$0xf]
        %v1624 = vld [vmem:[#allocation8 + $0x180] sm:$0xf]
        %v1625 = vld [vmem:[#allocation8 + $0x184] sm:$0xf]
        %v1626 = vld [vmem:[#allocation8 + $0x188] sm:$0xf]
        %v1627 = vld [vmem:[#allocation8 + $0x18c] sm:$0xf]
        %v1628 = vld [vmem:[#allocation8 + $0x190] sm:$0xf]
        %v1629 = vld [vmem:[#allocation8 + $0x194] sm:$0xf]
        %v1630 = vld [vmem:[#allocation8 + $0x198] sm:$0xf]
        %v1631 = vld [vmem:[#allocation8 + $0x19c] sm:$0xf]
        %v1632 = vld [vmem:[#allocation8 + $0x1a0] sm:$0xf]
        %v1633 = vld [vmem:[#allocation8 + $0x1a4] sm:$0xf]
        %v1634 = vld [vmem:[#allocation8 + $0x1a8] sm:$0xf]
        %v1635 = vld [vmem:[#allocation8 + $0x1ac] sm:$0xf]
        %v1636 = vld [vmem:[#allocation8 + $0x1b0] sm:$0xf]
        %v1637 = vld [vmem:[#allocation8 + $0x1b4] sm:$0xf]
        %v1638 = vld [vmem:[#allocation8 + $0x1b8] sm:$0xf]
        %v1639 = vld [vmem:[#allocation8 + $0x1bc] sm:$0xf]
        %v1640 = vld [vmem:[#allocation8 + $0x1c0] sm:$0xf]
        %v1641 = vld [vmem:[#allocation8 + $0x1c4] sm:$0xf]
        %v1642 = vld [vmem:[#allocation8 + $0x1c8] sm:$0xf]
        %v1643 = vld [vmem:[#allocation8 + $0x1cc] sm:$0xf]
        %v1644 = vld [vmem:[#allocation8 + $0x1d0] sm:$0xf]
        %v1645 = vld [vmem:[#allocation8 + $0x1d4] sm:$0xf]
        %v1646 = vld [vmem:[#allocation8 + $0x1d8] sm:$0xf]
        %v1647 = vld [vmem:[#allocation8 + $0x1dc] sm:$0xf]
        %v1648 = vld [vmem:[#allocation8 + $0x1e0] sm:$0xf]
        %v1649 = vld [vmem:[#allocation8 + $0x1e4] sm:$0xf]
        %v1650 = vld [vmem:[#allocation8 + $0x1e8] sm:$0xf]
        %v1651 = vld [vmem:[#allocation8 + $0x1ec] sm:$0xf]
        %v1652 = vld [vmem:[#allocation8 + $0x1f0] sm:$0xf]
        %v1653 = vld [vmem:[#allocation8 + $0x1f4] sm:$0xf]
        %v1654 = vld [vmem:[#allocation8 + $0x1f8] sm:$0xf]
        %v1655 = vld [vmem:[#allocation8 + $0x1fc] sm:$0xf]
        %v1656 = vld [vmem:[#allocation8 + $0x200] sm:$0xf]
        %v1657 = vld [vmem:[#allocation8 + $0x204] sm:$0xf]
        %v1658 = vld [vmem:[#allocation8 + $0x208] sm:$0xf]
        %v1659 = vld [vmem:[#allocation8 + $0x20c] sm:$0xf]
        %v1660 = vld [vmem:[#allocation8 + $0x210] sm:$0xf]
        %v1661 = vld [vmem:[#allocation8 + $0x214] sm:$0xf]
        %v1662 = vld [vmem:[#allocation8 + $0x218] sm:$0xf]
        %v1663 = vld [vmem:[#allocation8 + $0x21c] sm:$0xf]
        %v1664 = vld [vmem:[#allocation8 + $0x220] sm:$0xf]
        %v1665 = vld [vmem:[#allocation8 + $0x224] sm:$0xf]
        %v1666 = vld [vmem:[#allocation8 + $0x228] sm:$0xf]
        %v1667 = vld [vmem:[#allocation8 + $0x22c] sm:$0xf]
        %v1668 = vld [vmem:[#allocation8 + $0x230] sm:$0xf]
        %v1669 = vld [vmem:[#allocation8 + $0x234] sm:$0xf]
        %v1670 = vld [vmem:[#allocation8 + $0x238] sm:$0xf]
        %v1671 = vld [vmem:[#allocation8 + $0x23c] sm:$0xf]
        %v1816 = vunpack.c.l.b16 %v1528
        %v1817 = vunpack.c.l.b16 %v1529
        %v1818 = vunpack.c.l.b16 %v1530
        %v1819 = vunpack.c.l.b16 %v1531
        %v1820 = vunpack.c.l.b16 %v1532
        %v1821 = vunpack.c.l.b16 %v1533
        %v1822 = vunpack.c.l.b16 %v1534
        %v1823 = vunpack.c.l.b16 %v1535
        %v1824 = vunpack.c.l.b16 %v1536
        %v1825 = vunpack.c.l.b16 %v1537
        %v1826 = vunpack.c.l.b16 %v1538
        %v1827 = vunpack.c.l.b16 %v1539
        %v1828 = vunpack.c.l.b16 %v1540
        %v1829 = vunpack.c.l.b16 %v1541
        %v1830 = vunpack.c.l.b16 %v1542
        %v1831 = vunpack.c.l.b16 %v1543
        %v1832 = vunpack.c.l.b16 %v1544
        %v1833 = vunpack.c.l.b16 %v1545
        %v1834 = vunpack.c.l.b16 %v1546
        %v1835 = vunpack.c.l.b16 %v1547
        %v1836 = vunpack.c.l.b16 %v1548
        %v1837 = vunpack.c.l.b16 %v1549
        %v1838 = vunpack.c.l.b16 %v1550
        %v1839 = vunpack.c.l.b16 %v1551
        %v1840 = vunpack.c.l.b16 %v1552
        %v1841 = vunpack.c.l.b16 %v1553
        %v1842 = vunpack.c.l.b16 %v1554
        %v1843 = vunpack.c.l.b16 %v1555
        %v1844 = vunpack.c.l.b16 %v1556
        %v1845 = vunpack.c.l.b16 %v1557
        %v1846 = vunpack.c.l.b16 %v1558
        %v1847 = vunpack.c.l.b16 %v1559
        %v1848 = vunpack.c.l.b16 %v1560
        %v1849 = vunpack.c.l.b16 %v1561
        %v1850 = vunpack.c.l.b16 %v1562
        %v1851 = vunpack.c.l.b16 %v1563
        %v1852 = vunpack.c.l.b16 %v1564
        %v1853 = vunpack.c.l.b16 %v1565
        %v1854 = vunpack.c.l.b16 %v1566
        %v1855 = vunpack.c.l.b16 %v1567
        %v1856 = vunpack.c.l.b16 %v1568
        %v1857 = vunpack.c.l.b16 %v1569
        %v1858 = vunpack.c.l.b16 %v1570
        %v1859 = vunpack.c.l.b16 %v1571
        %v1860 = vunpack.c.l.b16 %v1572
        %v1861 = vunpack.c.l.b16 %v1573
        %v1862 = vunpack.c.l.b16 %v1574
        %v1863 = vunpack.c.l.b16 %v1575
        %v1864 = vunpack.c.l.b16 %v1576
        %v1865 = vunpack.c.l.b16 %v1577
        %v1866 = vunpack.c.l.b16 %v1578
        %v1867 = vunpack.c.l.b16 %v1579
        %v1868 = vunpack.c.l.b16 %v1580
        %v1869 = vunpack.c.l.b16 %v1581
        %v1870 = vunpack.c.l.b16 %v1582
        %v1871 = vunpack.c.l.b16 %v1583
        %v1872 = vunpack.c.l.b16 %v1584
        %v1873 = vunpack.c.l.b16 %v1585
        %v1874 = vunpack.c.l.b16 %v1586
        %v1875 = vunpack.c.l.b16 %v1587
        %v1876 = vunpack.c.l.b16 %v1588
        %v1877 = vunpack.c.l.b16 %v1589
        %v1878 = vunpack.c.l.b16 %v1590
        %v1879 = vunpack.c.l.b16 %v1591
        %v1880 = vunpack.c.l.b16 %v1592
        %v1881 = vunpack.c.l.b16 %v1593
        %v1882 = vunpack.c.l.b16 %v1594
        %v1883 = vunpack.c.l.b16 %v1595
        %v1884 = vunpack.c.l.b16 %v1596
        %v1885 = vunpack.c.l.b16 %v1597
        %v1886 = vunpack.c.l.b16 %v1598
        %v1887 = vunpack.c.l.b16 %v1599
        %v1888 = vunpack.c.l.b16 %v1600
        %v1889 = vunpack.c.l.b16 %v1601
        %v1890 = vunpack.c.l.b16 %v1602
        %v1891 = vunpack.c.l.b16 %v1603
        %v1892 = vunpack.c.l.b16 %v1604
        %v1893 = vunpack.c.l.b16 %v1605
        %v1894 = vunpack.c.l.b16 %v1606
        %v1895 = vunpack.c.l.b16 %v1607
        %v1896 = vunpack.c.l.b16 %v1608
        %v1897 = vunpack.c.l.b16 %v1609
        %v1898 = vunpack.c.l.b16 %v1610
        %v1899 = vunpack.c.l.b16 %v1611
        %v1900 = vunpack.c.l.b16 %v1612
        %v1901 = vunpack.c.l.b16 %v1613
        %v1902 = vunpack.c.l.b16 %v1614
        %v1903 = vunpack.c.l.b16 %v1615
        %v1904 = vunpack.c.l.b16 %v1616
        %v1905 = vunpack.c.l.b16 %v1617
        %v1906 = vunpack.c.l.b16 %v1618
        %v1907 = vunpack.c.l.b16 %v1619
        %v1908 = vunpack.c.l.b16 %v1620
        %v1909 = vunpack.c.l.b16 %v1621
        %v1910 = vunpack.c.l.b16 %v1622
        %v1911 = vunpack.c.l.b16 %v1623
        %v1912 = vunpack.c.l.b16 %v1624
        %v1913 = vunpack.c.l.b16 %v1625
        %v1914 = vunpack.c.l.b16 %v1626
        %v1915 = vunpack.c.l.b16 %v1627
        %v1916 = vunpack.c.l.b16 %v1628
        %v1917 = vunpack.c.l.b16 %v1629
        %v1918 = vunpack.c.l.b16 %v1630
        %v1919 = vunpack.c.l.b16 %v1631
        %v1920 = vunpack.c.l.b16 %v1632
        %v1921 = vunpack.c.l.b16 %v1633
        %v1922 = vunpack.c.l.b16 %v1634
        %v1923 = vunpack.c.l.b16 %v1635
        %v1924 = vunpack.c.l.b16 %v1636
        %v1925 = vunpack.c.l.b16 %v1637
        %v1926 = vunpack.c.l.b16 %v1638
        %v1927 = vunpack.c.l.b16 %v1639
        %v1928 = vunpack.c.l.b16 %v1640
        %v1929 = vunpack.c.l.b16 %v1641
        %v1930 = vunpack.c.l.b16 %v1642
        %v1931 = vunpack.c.l.b16 %v1643
        %v1932 = vunpack.c.l.b16 %v1644
        %v1933 = vunpack.c.l.b16 %v1645
        %v1934 = vunpack.c.l.b16 %v1646
        %v1935 = vunpack.c.l.b16 %v1647
        %v1936 = vunpack.c.l.b16 %v1648
        %v1937 = vunpack.c.l.b16 %v1649
        %v1938 = vunpack.c.l.b16 %v1650
        %v1939 = vunpack.c.l.b16 %v1651
        %v1940 = vunpack.c.l.b16 %v1652
        %v1941 = vunpack.c.l.b16 %v1653
        %v1942 = vunpack.c.l.b16 %v1654
        %v1943 = vunpack.c.l.b16 %v1655
        %v1944 = vunpack.c.l.b16 %v1656
        %v1945 = vunpack.c.l.b16 %v1657
        %v1946 = vunpack.c.l.b16 %v1658
        %v1947 = vunpack.c.l.b16 %v1659
        %v1948 = vunpack.c.l.b16 %v1660
        %v1949 = vunpack.c.l.b16 %v1661
        %v1950 = vunpack.c.l.b16 %v1662
        %v1951 = vunpack.c.l.b16 %v1663
        %v1952 = vunpack.c.l.b16 %v1664
        %v1953 = vunpack.c.l.b16 %v1665
        %v1954 = vunpack.c.l.b16 %v1666
        %v1955 = vunpack.c.l.b16 %v1667
        %v1956 = vunpack.c.l.b16 %v1668
        %v1957 = vunpack.c.l.b16 %v1669
        %v1958 = vunpack.c.l.b16 %v1670
        %v1959 = vunpack.c.l.b16 %v1671
        %v1960 = vpack.c.b16 %v1817, %v1816
        %v1961 = vpack.c.b16 %v1819, %v1818
        %v1962 = vpack.c.b16 %v1821, %v1820
        %v1963 = vpack.c.b16 %v1823, %v1822
        %v1964 = vpack.c.b16 %v1825, %v1824
        %v1965 = vpack.c.b16 %v1827, %v1826
        %v1966 = vpack.c.b16 %v1829, %v1828
        %v1967 = vpack.c.b16 %v1831, %v1830
        %v1968 = vpack.c.b16 %v1833, %v1832
        %v1969 = vpack.c.b16 %v1835, %v1834
        %v1970 = vpack.c.b16 %v1837, %v1836
        %v1971 = vpack.c.b16 %v1839, %v1838
        %v1972 = vpack.c.b16 %v1841, %v1840
        %v1973 = vpack.c.b16 %v1843, %v1842
        %v1974 = vpack.c.b16 %v1845, %v1844
        %v1975 = vpack.c.b16 %v1847, %v1846
        %v1976 = vpack.c.b16 %v1849, %v1848
        %v1977 = vpack.c.b16 %v1851, %v1850
        %v1978 = vpack.c.b16 %v1853, %v1852
        %v1979 = vpack.c.b16 %v1855, %v1854
        %v1980 = vpack.c.b16 %v1857, %v1856
        %v1981 = vpack.c.b16 %v1859, %v1858
        %v1982 = vpack.c.b16 %v1861, %v1860
        %v1983 = vpack.c.b16 %v1863, %v1862
        %v1984 = vpack.c.b16 %v1865, %v1864
        %v1985 = vpack.c.b16 %v1867, %v1866
        %v1986 = vpack.c.b16 %v1869, %v1868
        %v1987 = vpack.c.b16 %v1871, %v1870
        %v1988 = vpack.c.b16 %v1873, %v1872
        %v1989 = vpack.c.b16 %v1875, %v1874
        %v1990 = vpack.c.b16 %v1877, %v1876
        %v1991 = vpack.c.b16 %v1879, %v1878
        %v1992 = vpack.c.b16 %v1881, %v1880
        %v1993 = vpack.c.b16 %v1883, %v1882
        %v1994 = vpack.c.b16 %v1885, %v1884
        %v1995 = vpack.c.b16 %v1887, %v1886
        %v1996 = vpack.c.b16 %v1889, %v1888
        %v1997 = vpack.c.b16 %v1891, %v1890
        %v1998 = vpack.c.b16 %v1893, %v1892
        %v1999 = vpack.c.b16 %v1895, %v1894
        %v2000 = vpack.c.b16 %v1897, %v1896
        %v2001 = vpack.c.b16 %v1899, %v1898
        %v2002 = vpack.c.b16 %v1901, %v1900
        %v2003 = vpack.c.b16 %v1903, %v1902
        %v2004 = vpack.c.b16 %v1905, %v1904
        %v2005 = vpack.c.b16 %v1907, %v1906
        %v2006 = vpack.c.b16 %v1909, %v1908
        %v2007 = vpack.c.b16 %v1911, %v1910
        %v2008 = vpack.c.b16 %v1913, %v1912
        %v2009 = vpack.c.b16 %v1915, %v1914
        %v2010 = vpack.c.b16 %v1917, %v1916
        %v2011 = vpack.c.b16 %v1919, %v1918
        %v2012 = vpack.c.b16 %v1921, %v1920
        %v2013 = vpack.c.b16 %v1923, %v1922
        %v2014 = vpack.c.b16 %v1925, %v1924
        %v2015 = vpack.c.b16 %v1927, %v1926
        %v2016 = vpack.c.b16 %v1929, %v1928
        %v2017 = vpack.c.b16 %v1931, %v1930
        %v2018 = vpack.c.b16 %v1933, %v1932
        %v2019 = vpack.c.b16 %v1935, %v1934
        %v2020 = vpack.c.b16 %v1937, %v1936
        %v2021 = vpack.c.b16 %v1939, %v1938
        %v2022 = vpack.c.b16 %v1941, %v1940
        %v2023 = vpack.c.b16 %v1943, %v1942
        %v2024 = vpack.c.b16 %v1945, %v1944
        %v2025 = vpack.c.b16 %v1947, %v1946
        %v2026 = vpack.c.b16 %v1949, %v1948
        %v2027 = vpack.c.b16 %v1951, %v1950
        %v2028 = vpack.c.b16 %v1953, %v1952
        %v2029 = vpack.c.b16 %v1955, %v1954
        %v2030 = vpack.c.b16 %v1957, %v1956
        %v2031 = vpack.c.b16 %v1959, %v1958
        %2104 = vmatprep.subr.bf16.mxu0 0
        %2105 = vmatpush1.bf16.msra.mxu0 %v1967
        %2106 = vmatprep.subr.bf16.mxu0 0
        %2107 = vmatpush1.bf16.msra.mxu0 %v1966
        %2108 = vmatprep.subr.bf16.mxu0 0
        %2109 = vmatpush1.bf16.msra.mxu0 %v1965
        %2110 = vmatprep.subr.bf16.mxu0 0
        %2111 = vmatpush1.bf16.msra.mxu0 %v1964
        %2112 = vmatprep.subr.bf16.mxu0 0
        %2113 = vmatpush1.bf16.msra.mxu0 %v1963
        %2114 = vmatprep.subr.bf16.mxu0 0
        %2115 = vmatpush1.bf16.msra.mxu0 %v1962
        %2116 = vmatprep.subr.bf16.mxu0 0
        %2117 = vmatpush1.bf16.msra.mxu0 %v1961
        %2118 = vmatprep.subr.bf16.mxu0 0
        %2119 = vmatpush1.bf16.msra.mxu0 %v1960
        %2120 = vmatprep.subr.bf16.mxu0 0
        %2121 = vmatpush2.bf16.msra.mxu0 %v1975
        %2122 = vmatprep.subr.bf16.mxu0 0
        %2123 = vmatpush2.bf16.msra.mxu0 %v1974
        %2124 = vmatprep.subr.bf16.mxu0 0
        %2125 = vmatpush2.bf16.msra.mxu0 %v1973
        %2126 = vmatprep.subr.bf16.mxu0 0
        %2127 = vmatpush2.bf16.msra.mxu0 %v1972
        %2128 = vmatprep.subr.bf16.mxu0 0
        %2129 = vmatpush2.bf16.msra.mxu0 %v1971
        %2130 = vmatprep.subr.bf16.mxu0 0
        %2131 = vmatpush2.bf16.msra.mxu0 %v1970
        %2132 = vmatprep.subr.bf16.mxu0 0
        %2133 = vmatpush2.bf16.msra.mxu0 %v1969
        %2134 = vmatprep.subr.bf16.mxu0 0
        %2135 = vmatpush2.bf16.msra.mxu0 %v1968
        %2136 = vmatprep.mubr.bf16.mxu0 %v1392
        %2137 = vmatmul.mubr.bf16.gmra.mxu0 %v1376
        %v2138 = vpop.f32.mrf.mxu0
        %v2139 = vadd.f32 0.0, %v2138
        %v2140 = vpop.f32.mrf.mxu0
        %v2141 = vpop.f32.mrf.mxu0
        %v2142 = vadd.f32 0.0, %v2141
        %v2143 = vpop.f32.mrf.mxu0
        %2144 = vmatprep.mubr.bf16.mxu0 %v1393
        %2145 = vmatmul.mubr.bf16.gmra.mxu0 %v1377
        %v2146 = vpop.f32.mrf.mxu0
        %v2147 = vadd.f32 0.0, %v2146
        %v2148 = vpop.f32.mrf.mxu0
        %v2149 = vpop.f32.mrf.mxu0
        %v2150 = vadd.f32 0.0, %v2149
        %v2151 = vpop.f32.mrf.mxu0
        %2152 = vmatprep.mubr.bf16.mxu0 %v1394
        %2153 = vmatmul.mubr.bf16.gmra.mxu0 %v1378
        %v2154 = vpop.f32.mrf.mxu0
        %v2155 = vadd.f32 0.0, %v2154
        %v2156 = vpop.f32.mrf.mxu0
        %v2157 = vpop.f32.mrf.mxu0
        %v2158 = vadd.f32 0.0, %v2157
        %v2159 = vpop.f32.mrf.mxu0
        %2160 = vmatprep.mubr.bf16.mxu0 %v1395
        %2161 = vmatmul.mubr.bf16.gmra.mxu0 %v1379
        %v2162 = vpop.f32.mrf.mxu0
        %v2163 = vadd.f32 0.0, %v2162
        %v2164 = vpop.f32.mrf.mxu0
        %v2165 = vpop.f32.mrf.mxu0
        %v2166 = vadd.f32 0.0, %v2165
        %v2167 = vpop.f32.mrf.mxu0
        %2168 = vdwg.mxu0
        %2169 = vmatprep.subr.bf16.mxu0 0
        %2170 = vmatpush1.bf16.msra.mxu0 %v1983
        %2171 = vmatprep.subr.bf16.mxu0 0
        %2172 = vmatpush1.bf16.msra.mxu0 %v1982
        %2173 = vmatprep.subr.bf16.mxu0 0
        %2174 = vmatpush1.bf16.msra.mxu0 %v1981
        %2175 = vmatprep.subr.bf16.mxu0 0
        %2176 = vmatpush1.bf16.msra.mxu0 %v1980
        %2177 = vmatprep.subr.bf16.mxu0 0
        %2178 = vmatpush1.bf16.msra.mxu0 %v1979
        %2179 = vmatprep.subr.bf16.mxu0 0
        %2180 = vmatpush1.bf16.msra.mxu0 %v1978
        %2181 = vmatprep.subr.bf16.mxu0 0
        %2182 = vmatpush1.bf16.msra.mxu0 %v1977
        %2183 = vmatprep.subr.bf16.mxu0 0
        %2184 = vmatpush1.bf16.msra.mxu0 %v1976
        %2185 = vmatprep.subr.bf16.mxu0 0
        %2186 = vmatpush2.bf16.msra.mxu0 %v1991
        %2187 = vmatprep.subr.bf16.mxu0 0
        %2188 = vmatpush2.bf16.msra.mxu0 %v1990
        %2189 = vmatprep.subr.bf16.mxu0 0
        %2190 = vmatpush2.bf16.msra.mxu0 %v1989
        %2191 = vmatprep.subr.bf16.mxu0 0
        %2192 = vmatpush2.bf16.msra.mxu0 %v1988
        %2193 = vmatprep.subr.bf16.mxu0 0
        %2194 = vmatpush2.bf16.msra.mxu0 %v1987
        %2195 = vmatprep.subr.bf16.mxu0 0
        %2196 = vmatpush2.bf16.msra.mxu0 %v1986
        %2197 = vmatprep.subr.bf16.mxu0 0
        %2198 = vmatpush2.bf16.msra.mxu0 %v1985
        %2199 = vmatprep.subr.bf16.mxu0 0
        %2200 = vmatpush2.bf16.msra.mxu0 %v1984
        %2201 = vmatprep.mubr.bf16.mxu0 %v1432
        %2202 = vmatmul.mubr.bf16.gmra.mxu0 %v1408
        %v2203 = vpop.f32.mrf.mxu0
        %v2204 = vadd.f32 %v2139, %v2203
        %v2205 = vpop.f32.mrf.mxu0
        %v2206 = vpop.f32.mrf.mxu0
        %v2207 = vadd.f32 %v2142, %v2206
        %v2208 = vpop.f32.mrf.mxu0
        %2209 = vmatprep.mubr.bf16.mxu0 %v1433
        %2210 = vmatmul.mubr.bf16.gmra.mxu0 %v1409
        %v2211 = vpop.f32.mrf.mxu0
        %v2212 = vadd.f32 %v2147, %v2211
        %v2213 = vpop.f32.mrf.mxu0
        %v2214 = vpop.f32.mrf.mxu0
        %v2215 = vadd.f32 %v2150, %v2214
        %v2216 = vpop.f32.mrf.mxu0
        %2217 = vmatprep.mubr.bf16.mxu0 %v1434
        %2218 = vmatmul.mubr.bf16.gmra.mxu0 %v1410
        %v2219 = vpop.f32.mrf.mxu0
        %v2220 = vadd.f32 %v2155, %v2219
        %v2221 = vpop.f32.mrf.mxu0
        %v2222 = vpop.f32.mrf.mxu0
        %v2223 = vadd.f32 %v2158, %v2222
        %v2224 = vpop.f32.mrf.mxu0
        %2225 = vmatprep.mubr.bf16.mxu0 %v1435
        %2226 = vmatmul.mubr.bf16.gmra.mxu0 %v1411
        %v2227 = vpop.f32.mrf.mxu0
        %v2228 = vadd.f32 %v2163, %v2227
        %v2229 = vpop.f32.mrf.mxu0
        %v2230 = vpop.f32.mrf.mxu0
        %v2231 = vadd.f32 %v2166, %v2230
        %v2232 = vpop.f32.mrf.mxu0
        %2233 = vdwg.mxu0
        %2234 = vmatprep.subr.bf16.mxu0 0
        %2235 = vmatpush1.bf16.msra.mxu0 %v1999
        %2236 = vmatprep.subr.bf16.mxu0 0
        %2237 = vmatpush1.bf16.msra.mxu0 %v1998
        %2238 = vmatprep.subr.bf16.mxu0 0
        %2239 = vmatpush1.bf16.msra.mxu0 %v1997
        %2240 = vmatprep.subr.bf16.mxu0 0
        %2241 = vmatpush1.bf16.msra.mxu0 %v1996
        %2242 = vmatprep.subr.bf16.mxu0 0
        %2243 = vmatpush1.bf16.msra.mxu0 %v1995
        %2244 = vmatprep.subr.bf16.mxu0 0
        %2245 = vmatpush1.bf16.msra.mxu0 %v1994
        %2246 = vmatprep.subr.bf16.mxu0 0
        %2247 = vmatpush1.bf16.msra.mxu0 %v1993
        %2248 = vmatprep.subr.bf16.mxu0 0
        %2249 = vmatpush1.bf16.msra.mxu0 %v1992
        %2250 = vmatprep.subr.bf16.mxu0 0
        %2251 = vmatpush2.bf16.msra.mxu0 %v2007
        %2252 = vmatprep.subr.bf16.mxu0 0
        %2253 = vmatpush2.bf16.msra.mxu0 %v2006
        %2254 = vmatprep.subr.bf16.mxu0 0
        %2255 = vmatpush2.bf16.msra.mxu0 %v2005
        %2256 = vmatprep.subr.bf16.mxu0 0
        %2257 = vmatpush2.bf16.msra.mxu0 %v2004
        %2258 = vmatprep.subr.bf16.mxu0 0
        %2259 = vmatpush2.bf16.msra.mxu0 %v2003
        %2260 = vmatprep.subr.bf16.mxu0 0
        %2261 = vmatpush2.bf16.msra.mxu0 %v2002
        %2262 = vmatprep.subr.bf16.mxu0 0
        %2263 = vmatpush2.bf16.msra.mxu0 %v2001
        %2264 = vmatprep.subr.bf16.mxu0 0
        %2265 = vmatpush2.bf16.msra.mxu0 %v2000
        %2266 = vmatprep.mubr.bf16.mxu0 %v1464
        %2267 = vmatmul.mubr.bf16.gmra.mxu0 %v1448
        %v2268 = vpop.f32.mrf.mxu0
        %v2269 = vadd.f32 %v2204, %v2268
        %v2270 = vpop.f32.mrf.mxu0
        %v2271 = vpop.f32.mrf.mxu0
        %v2272 = vadd.f32 %v2207, %v2271
        %v2273 = vpop.f32.mrf.mxu0
        %2274 = vmatprep.mubr.bf16.mxu0 %v1465
        %2275 = vmatmul.mubr.bf16.gmra.mxu0 %v1449
        %v2276 = vpop.f32.mrf.mxu0
        %v2277 = vadd.f32 %v2212, %v2276
        %v2278 = vpop.f32.mrf.mxu0
        %v2279 = vpop.f32.mrf.mxu0
        %v2280 = vadd.f32 %v2215, %v2279
        %v2281 = vpop.f32.mrf.mxu0
        %2282 = vmatprep.mubr.bf16.mxu0 %v1466
        %2283 = vmatmul.mubr.bf16.gmra.mxu0 %v1450
        %v2284 = vpop.f32.mrf.mxu0
        %v2285 = vadd.f32 %v2220, %v2284
        %v2286 = vpop.f32.mrf.mxu0
        %v2287 = vpop.f32.mrf.mxu0
        %v2288 = vadd.f32 %v2223, %v2287
        %v2289 = vpop.f32.mrf.mxu0
        %2290 = vmatprep.mubr.bf16.mxu0 %v1467
        %2291 = vmatmul.mubr.bf16.gmra.mxu0 %v1451
        %v2292 = vpop.f32.mrf.mxu0
        %v2293 = vadd.f32 %v2228, %v2292
        %v2294 = vpop.f32.mrf.mxu0
        %v2295 = vpop.f32.mrf.mxu0
        %v2296 = vadd.f32 %v2231, %v2295
        %v2297 = vpop.f32.mrf.mxu0
        %2298 = vdwg.mxu0
        %2299 = vmatprep.subr.bf16.mxu0 0
        %2300 = vmatpush1.bf16.msra.mxu0 %v2015
        %2301 = vmatprep.subr.bf16.mxu0 0
        %2302 = vmatpush1.bf16.msra.mxu0 %v2014
        %2303 = vmatprep.subr.bf16.mxu0 0
        %2304 = vmatpush1.bf16.msra.mxu0 %v2013
        %2305 = vmatprep.subr.bf16.mxu0 0
        %2306 = vmatpush1.bf16.msra.mxu0 %v2012
        %2307 = vmatprep.subr.bf16.mxu0 0
        %2308 = vmatpush1.bf16.msra.mxu0 %v2011
        %2309 = vmatprep.subr.bf16.mxu0 0
        %2310 = vmatpush1.bf16.msra.mxu0 %v2010
        %2311 = vmatprep.subr.bf16.mxu0 0
        %2312 = vmatpush1.bf16.msra.mxu0 %v2009
        %2313 = vmatprep.subr.bf16.mxu0 0
        %2314 = vmatpush1.bf16.msra.mxu0 %v2008
        %2315 = vmatprep.subr.bf16.mxu0 0
        %2316 = vmatpush2.bf16.msra.mxu0 %v2023
        %2317 = vmatprep.subr.bf16.mxu0 0
        %2318 = vmatpush2.bf16.msra.mxu0 %v2022
        %2319 = vmatprep.subr.bf16.mxu0 0
        %2320 = vmatpush2.bf16.msra.mxu0 %v2021
        %2321 = vmatprep.subr.bf16.mxu0 0
        %2322 = vmatpush2.bf16.msra.mxu0 %v2020
        %2323 = vmatprep.subr.bf16.mxu0 0
        %2324 = vmatpush2.bf16.msra.mxu0 %v2019
        %2325 = vmatprep.subr.bf16.mxu0 0
        %2326 = vmatpush2.bf16.msra.mxu0 %v2018
        %2327 = vmatprep.subr.bf16.mxu0 0
        %2328 = vmatpush2.bf16.msra.mxu0 %v2017
        %2329 = vmatprep.subr.bf16.mxu0 0
        %2330 = vmatpush2.bf16.msra.mxu0 %v2016
        %2331 = vmatprep.mubr.bf16.mxu0 %v1504
        %2332 = vmatmul.mubr.bf16.gmra.mxu0 %v1488
        %v2333 = vpop.f32.mrf.mxu0
        %v2334 = vadd.f32 %v2269, %v2333
        %v2335 = vpop.f32.mrf.mxu0
        %v2336 = vpop.f32.mrf.mxu0
        %v2337 = vadd.f32 %v2272, %v2336
        %v2338 = vpop.f32.mrf.mxu0
        %2339 = vmatprep.mubr.bf16.mxu0 %v1505
        %2340 = vmatmul.mubr.bf16.gmra.mxu0 %v1489
        %v2341 = vpop.f32.mrf.mxu0
        %v2342 = vadd.f32 %v2277, %v2341
        %v2343 = vpop.f32.mrf.mxu0
        %v2344 = vpop.f32.mrf.mxu0
        %v2345 = vadd.f32 %v2280, %v2344
        %v2346 = vpop.f32.mrf.mxu0
        %2347 = vmatprep.mubr.bf16.mxu0 %v1506
        %2348 = vmatmul.mubr.bf16.gmra.mxu0 %v1490
        %v2349 = vpop.f32.mrf.mxu0
        %v2350 = vadd.f32 %v2285, %v2349
        %v2351 = vpop.f32.mrf.mxu0
        %v2352 = vpop.f32.mrf.mxu0
        %v2353 = vadd.f32 %v2288, %v2352
        %v2354 = vpop.f32.mrf.mxu0
        %2355 = vmatprep.mubr.bf16.mxu0 %v1507
        %2356 = vmatmul.mubr.bf16.gmra.mxu0 %v1491
        %v2357 = vpop.f32.mrf.mxu0
        %v2358 = vadd.f32 %v2293, %v2357
        %v2359 = vpop.f32.mrf.mxu0
        %v2360 = vpop.f32.mrf.mxu0
        %v2361 = vadd.f32 %v2296, %v2360
        %v2362 = vpop.f32.mrf.mxu0
        %2363 = vdwg.mxu0
        %2364 = vmatprep.subr.bf16.mxu0 0
        %2365 = vmatpush1.bf16.msra.mxu0 %v2031
        %2366 = vmatprep.subr.bf16.mxu0 0
        %2367 = vmatpush1.bf16.msra.mxu0 %v2030
        %2368 = vmatprep.subr.bf16.mxu0 0
        %2369 = vmatpush1.bf16.msra.mxu0 %v2029
        %2370 = vmatprep.subr.bf16.mxu0 0
        %2371 = vmatpush1.bf16.msra.mxu0 %v2028
        %2372 = vmatprep.subr.bf16.mxu0 0
        %2373 = vmatpush1.bf16.msra.mxu0 %v2027
        %2374 = vmatprep.subr.bf16.mxu0 0
        %2375 = vmatpush1.bf16.msra.mxu0 %v2026
        %2376 = vmatprep.subr.bf16.mxu0 0
        %2377 = vmatpush1.bf16.msra.mxu0 %v2025
        %2378 = vmatprep.subr.bf16.mxu0 0
        %2379 = vmatpush1.bf16.msra.mxu0 %v2024
        %2380 = vmatprep.subr.bf16.mxu0 0
        %2381 = vmatpush2.bf16.msra.mxu0 0
        %2382 = vmatprep.subr.bf16.mxu0 0
        %2383 = vmatpush2.bf16.msra.mxu0 0
        %2384 = vmatprep.subr.bf16.mxu0 0
        %2385 = vmatpush2.bf16.msra.mxu0 0
        %2386 = vmatprep.subr.bf16.mxu0 0
        %2387 = vmatpush2.bf16.msra.mxu0 0
        %2388 = vmatprep.subr.bf16.mxu0 0
        %2389 = vmatpush2.bf16.msra.mxu0 0
        %2390 = vmatprep.subr.bf16.mxu0 0
        %2391 = vmatpush2.bf16.msra.mxu0 0
        %2392 = vmatprep.subr.bf16.mxu0 0
        %2393 = vmatpush2.bf16.msra.mxu0 0
        %2394 = vmatprep.subr.bf16.mxu0 0
        %2395 = vmatpush2.bf16.msra.mxu0 0
        %2396 = vmatprep.mubr.bf16.mxu0 0
        %2397 = vmatmul.mubr.bf16.gmra.mxu0 %v1520
        %v2398 = vpop.f32.mrf.mxu0
        %v2399 = vadd.f32 %v2334, %v2398
        %v2400 = vpop.f32.mrf.mxu0
        %v2401 = vpop.f32.mrf.mxu0
        %v2402 = vadd.f32 %v2337, %v2401
        %v2403 = vpop.f32.mrf.mxu0
        %2404 = vmatprep.mubr.bf16.mxu0 0
        %2405 = vmatmul.mubr.bf16.gmra.mxu0 %v1521
        %v2406 = vpop.f32.mrf.mxu0
        %v2407 = vadd.f32 %v2342, %v2406
        %v2408 = vpop.f32.mrf.mxu0
        %v2409 = vpop.f32.mrf.mxu0
        %v2410 = vadd.f32 %v2345, %v2409
        %v2411 = vpop.f32.mrf.mxu0
        %2412 = vmatprep.mubr.bf16.mxu0 0
        %2413 = vmatmul.mubr.bf16.gmra.mxu0 %v1522
        %v2414 = vpop.f32.mrf.mxu0
        %v2415 = vadd.f32 %v2350, %v2414
        %v2416 = vpop.f32.mrf.mxu0
        %v2417 = vpop.f32.mrf.mxu0
        %v2418 = vadd.f32 %v2353, %v2417
        %v2419 = vpop.f32.mrf.mxu0
        %2420 = vmatprep.mubr.bf16.mxu0 0
        %2421 = vmatmul.mubr.bf16.gmra.mxu0 %v1523
        %v2422 = vpop.f32.mrf.mxu0
        %v2423 = vadd.f32 %v2358, %v2422
        %v2424 = vpop.f32.mrf.mxu0
        %v2425 = vpop.f32.mrf.mxu0
        %v2426 = vadd.f32 %v2361, %v2425
        %v2427 = vpop.f32.mrf.mxu0
        %2428 = vdwg.mxu0
        %v2429 = vld [vmem:[%s5] sm:$0x1]
        %v2431 = vlaneseq
        %v2432 = vshrl.u32 %v2431, 7
        %v2433 = vsub.s32 0, %v2432
        %v2434 = vrot.slane %v2429, %v2433
        %v2436 = vmul.f32 %v2399, %v2434
        %v2437 = vmul.f32 %v2402, %v2434
        %v2438 = vmul.f32 %v2407, %v2434
        %v2439 = vmul.f32 %v2410, %v2434
        %v2440 = vmul.f32 %v2415, %v2434
        %v2441 = vmul.f32 %v2418, %v2434
        %v2442 = vmul.f32 %v2423, %v2434
        %v2443 = vmul.f32 %v2426, %v2434
        %v2444 = vld [vmem:[%s6] sm:$0x1]
        %v2446 = vlaneseq
        %v2447 = vshrl.u32 %v2446, 7
        %v2448 = vsub.s32 0, %v2447
        %v2449 = vrot.slane %v2444, %v2448
        %v2451 = vadd.f32 %v2436, %v2449
        %v2452 = vadd.f32 %v2437, %v2449
        %v2453 = vadd.f32 %v2438, %v2449
        %v2454 = vadd.f32 %v2439, %v2449
        %v2455 = vadd.f32 %v2440, %v2449
        %v2456 = vadd.f32 %v2441, %v2449
        %v2457 = vadd.f32 %v2442, %v2449
        %v2458 = vadd.f32 %v2443, %v2449
        %v2459 = vmax.f32 %v2451, 0.0
        %v2460 = vmax.f32 %v2452, 0.0
        %v2461 = vmax.f32 %v2453, 0.0
        %v2462 = vmax.f32 %v2454, 0.0
        %v2463 = vmax.f32 %v2455, 0.0
        %v2464 = vmax.f32 %v2456, 0.0
        %v2465 = vmax.f32 %v2457, 0.0
        %v2466 = vmax.f32 %v2458, 0.0
        %v2467 = vpack.c.bf16 %v2460, %v2459
        %v2468 = vpack.c.bf16 %v2462, %v2461
        %v2469 = vpack.c.bf16 %v2464, %v2463
        %v2470 = vpack.c.bf16 %v2466, %v2465
        %v2471 = vld [vmem:[#allocation9] sm:$0xf]
        %v2472 = vld [vmem:[#allocation9 + $0x4] sm:$0xf]
        %v2473 = vld [vmem:[#allocation9 + $0x8] sm:$0xf]
        %v2474 = vld [vmem:[#allocation9 + $0xc] sm:$0xf]
        %v2475 = vld [vmem:[#allocation9 + $0x10] sm:$0xf]
        %v2476 = vld [vmem:[#allocation9 + $0x14] sm:$0xf]
        %v2477 = vld [vmem:[#allocation9 + $0x18] sm:$0xf]
        %v2478 = vld [vmem:[#allocation9 + $0x1c] sm:$0xf]
        %v2479 = vld [vmem:[#allocation9 + $0x20] sm:$0xf]
        %v2480 = vld [vmem:[#allocation9 + $0x24] sm:$0xf]
        %v2481 = vld [vmem:[#allocation9 + $0x28] sm:$0xf]
        %v2482 = vld [vmem:[#allocation9 + $0x2c] sm:$0xf]
        %v2483 = vld [vmem:[#allocation9 + $0x30] sm:$0xf]
        %v2484 = vld [vmem:[#allocation9 + $0x34] sm:$0xf]
        %v2485 = vld [vmem:[#allocation9 + $0x38] sm:$0xf]
        %v2486 = vld [vmem:[#allocation9 + $0x3c] sm:$0xf]
        %v2503 = vunpack.c.l.b16 %v2471
        %v2504 = vunpack.c.l.b16 %v2472
        %v2505 = vunpack.c.l.b16 %v2473
        %v2506 = vunpack.c.l.b16 %v2474
        %v2507 = vunpack.c.l.b16 %v2475
        %v2508 = vunpack.c.l.b16 %v2476
        %v2509 = vunpack.c.l.b16 %v2477
        %v2510 = vunpack.c.l.b16 %v2478
        %v2511 = vunpack.c.l.b16 %v2479
        %v2512 = vunpack.c.l.b16 %v2480
        %v2513 = vunpack.c.l.b16 %v2481
        %v2514 = vunpack.c.l.b16 %v2482
        %v2515 = vunpack.c.l.b16 %v2483
        %v2516 = vunpack.c.l.b16 %v2484
        %v2517 = vunpack.c.l.b16 %v2485
        %v2518 = vunpack.c.l.b16 %v2486
        %v2519 = vpack.c.b16 %v2504, %v2503
        %v2520 = vpack.c.b16 %v2506, %v2505
        %v2521 = vpack.c.b16 %v2508, %v2507
        %v2522 = vpack.c.b16 %v2510, %v2509
        %v2523 = vpack.c.b16 %v2512, %v2511
        %v2524 = vpack.c.b16 %v2514, %v2513
        %v2525 = vpack.c.b16 %v2516, %v2515
        %v2526 = vpack.c.b16 %v2518, %v2517
        %2535 = vmatprep.subr.bf16.mxu0 0
        %2536 = vmatpush1.bf16.msra.mxu0 %v2526
        %2537 = vmatprep.subr.bf16.mxu0 0
        %2538 = vmatpush1.bf16.msra.mxu0 %v2525
        %2539 = vmatprep.subr.bf16.mxu0 0
        %2540 = vmatpush1.bf16.msra.mxu0 %v2524
        %2541 = vmatprep.subr.bf16.mxu0 0
        %2542 = vmatpush1.bf16.msra.mxu0 %v2523
        %2543 = vmatprep.subr.bf16.mxu0 0
        %2544 = vmatpush1.bf16.msra.mxu0 %v2522
        %2545 = vmatprep.subr.bf16.mxu0 0
        %2546 = vmatpush1.bf16.msra.mxu0 %v2521
        %2547 = vmatprep.subr.bf16.mxu0 0
        %2548 = vmatpush1.bf16.msra.mxu0 %v2520
        %2549 = vmatprep.subr.bf16.mxu0 0
        %2550 = vmatpush1.bf16.msra.mxu0 %v2519
        %2551 = vmatprep.subr.bf16.mxu0 0
        %2552 = vmatpush2.bf16.msra.mxu0 0
        %2553 = vmatprep.subr.bf16.mxu0 0
        %2554 = vmatpush2.bf16.msra.mxu0 0
        %2555 = vmatprep.subr.bf16.mxu0 0
        %2556 = vmatpush2.bf16.msra.mxu0 0
        %2557 = vmatprep.subr.bf16.mxu0 0
        %2558 = vmatpush2.bf16.msra.mxu0 0
        %2559 = vmatprep.subr.bf16.mxu0 0
        %2560 = vmatpush2.bf16.msra.mxu0 0
        %2561 = vmatprep.subr.bf16.mxu0 0
        %2562 = vmatpush2.bf16.msra.mxu0 0
        %2563 = vmatprep.subr.bf16.mxu0 0
        %2564 = vmatpush2.bf16.msra.mxu0 0
        %2565 = vmatprep.subr.bf16.mxu0 0
        %2566 = vmatpush2.bf16.msra.mxu0 0
        %2567 = vmatprep.mubr.bf16.mxu0 0
        %2568 = vmatmul.mubr.bf16.gmra.mxu0 %v2467
        %v2569 = vpop.f32.mrf.mxu0
        %v2570 = vadd.f32 0.0, %v2569
        %v2571 = vpop.f32.mrf.mxu0
        %v2572 = vpop.f32.mrf.mxu0
        %v2573 = vadd.f32 0.0, %v2572
        %v2574 = vpop.f32.mrf.mxu0
        %2575 = vmatprep.mubr.bf16.mxu0 0
        %2576 = vmatmul.mubr.bf16.gmra.mxu0 %v2468
        %v2577 = vpop.f32.mrf.mxu0
        %v2578 = vadd.f32 0.0, %v2577
        %v2579 = vpop.f32.mrf.mxu0
        %v2580 = vpop.f32.mrf.mxu0
        %v2581 = vadd.f32 0.0, %v2580
        %v2582 = vpop.f32.mrf.mxu0
        %2583 = vmatprep.mubr.bf16.mxu0 0
        %2584 = vmatmul.mubr.bf16.gmra.mxu0 %v2469
        %v2585 = vpop.f32.mrf.mxu0
        %v2586 = vadd.f32 0.0, %v2585
        %v2587 = vpop.f32.mrf.mxu0
        %v2588 = vpop.f32.mrf.mxu0
        %v2589 = vadd.f32 0.0, %v2588
        %v2590 = vpop.f32.mrf.mxu0
        %2591 = vmatprep.mubr.bf16.mxu0 0
        %2592 = vmatmul.mubr.bf16.gmra.mxu0 %v2470
        %v2593 = vpop.f32.mrf.mxu0
        %v2594 = vadd.f32 0.0, %v2593
        %v2595 = vpop.f32.mrf.mxu0
        %v2596 = vpop.f32.mrf.mxu0
        %v2597 = vadd.f32 0.0, %v2596
        %v2598 = vpop.f32.mrf.mxu0
        %2599 = vdwg.mxu0
        %v2600 = vld [vmem:[%s8] sm:$0x1]
        %v2602 = vlaneseq
        %v2603 = vshrl.u32 %v2602, 7
        %v2604 = vsub.s32 0, %v2603
        %v2605 = vrot.slane %v2600, %v2604
        %v2607 = vmul.f32 %v2570, %v2605
        %v2608 = vmul.f32 %v2573, %v2605
        %v2609 = vmul.f32 %v2578, %v2605
        %v2610 = vmul.f32 %v2581, %v2605
        %v2611 = vmul.f32 %v2586, %v2605
        %v2612 = vmul.f32 %v2589, %v2605
        %v2613 = vmul.f32 %v2594, %v2605
        %v2614 = vmul.f32 %v2597, %v2605
        %v2615 = vld [vmem:[%s9] sm:$0x1]
        %v2617 = vlaneseq
        %v2618 = vshrl.u32 %v2617, 7
        %v2619 = vsub.s32 0, %v2618
        %v2620 = vrot.slane %v2615, %v2619
        %v2622 = vadd.f32 %v2607, %v2620
        %v2623 = vadd.f32 %v2608, %v2620
        %v2624 = vadd.f32 %v2609, %v2620
        %v2625 = vadd.f32 %v2610, %v2620
        %v2626 = vadd.f32 %v2611, %v2620
        %v2627 = vadd.f32 %v2612, %v2620
        %v2628 = vadd.f32 %v2613, %v2620
        %v2629 = vadd.f32 %v2614, %v2620
        %v2630 = vunpack.c.l.bf16 %v423
        %v2631 = vunpack.c.l.bf16 %v424
        %v2632 = vunpack.c.l.bf16 %v425
        %v2633 = vunpack.c.l.bf16 %v426
        %v2634 = vunpack.c.l.bf16 %v427
        %v2635 = vunpack.c.l.bf16 %v428
        %v2636 = vunpack.c.l.bf16 %v429
        %v2637 = vunpack.c.l.bf16 %v430
        %v2638 = vadd.f32 %v2622, %v2630
        %v2639 = vadd.f32 %v2623, %v2631
        %v2640 = vadd.f32 %v2624, %v2632
        %v2641 = vadd.f32 %v2625, %v2633
        %v2642 = vadd.f32 %v2626, %v2634
        %v2643 = vadd.f32 %v2627, %v2635
        %v2644 = vadd.f32 %v2628, %v2636
        %v2645 = vadd.f32 %v2629, %v2637
        %v2646 = vmax.f32 %v2638, 0.0
        %v2647 = vmax.f32 %v2639, 0.0
        %v2648 = vmax.f32 %v2640, 0.0
        %v2649 = vmax.f32 %v2641, 0.0
        %v2650 = vmax.f32 %v2642, 0.0
        %v2651 = vmax.f32 %v2643, 0.0
        %v2652 = vmax.f32 %v2644, 0.0
        %v2653 = vmax.f32 %v2645, 0.0
        %2654 = vst [vmem:[%s421] sm:$0xff] %v2646
        %2655 = vst [vmem:[%s421 + $0x8] sm:$0xff] %v2647
        %2656 = vst [vmem:[%s421 + $0x10] sm:$0xff] %v2648
        %2657 = vst [vmem:[%s421 + $0x18] sm:$0xff] %v2649
        %2658 = vst [vmem:[%s421 + $0x20] sm:$0xff] %v2650
        %2659 = vst [vmem:[%s421 + $0x28] sm:$0xff] %v2651
        %2660 = vst [vmem:[%s421 + $0x30] sm:$0xff] %v2652
        %2661 = vst [vmem:[%s421 + $0x38] sm:$0xff] %v2653
        %s2662 = sand.u32 %s252, 1
        %s2663 = scalar_lea.sflag [#allocation5], %s2662
        %s2664 = sand.u32 %s252, 1
        %s2665 = smul.addr %s2664, 64
        %s2666 = scalar_lea.vmem [#allocation11], %s2665
        // Predicated region
        $region77: #{tpu_custom_call.1} parent=59 // pred_check
          %p2667 = pneg %p262
        $region78: #{tpu_custom_call.1} parent=59 // pred_check_branch
          %2669 = sbr.rel (%p2667) target = $region80
        $region79: #{tpu_custom_call.1} parent=59 // pred_region
          %s2671 = ssub.s32 1024, 1024
          %2672 = vsyncadd %s2663, %s2671
          %s2673 = smul.addr %s29, 8
          %s2674 = smul.addr %s2673, 128
          %s2675 = scalar_lea.hbm %s10, %s2674
          %s2676 = sshll.u32 %s2666, 4
          %s2677 = int_to_ptr.vmem [resolvable:$true] %s2676
          %2682 = dma.vmem_to_hbm [thread:$0]  %s2677, 1024, %s2675, %s2663, 128, 128, 8
        $region80: #{tpu_custom_call.1} parent=59 // pred_fallthru
          _
      $region60: #{tpu_custom_call.1} parent=5 // pred_fallthru
        _
      %p2683 = scmp.le.s32.totalorder 2, %s24
      // Predicated region
      $region81: #{tpu_custom_call.1} parent=5 // pred_check
        %p2684 = pneg %p2683
      $region82: #{tpu_custom_call.1} parent=5 // pred_check_branch
        %2686 = sbr.rel (%p2684) target = $region84
      $region83: #{tpu_custom_call.1} parent=5 // pred_region
        %s2687 = ssub.s32 %s24, 2
        // Predicated region
        $region85: #{tpu_custom_call.1} parent=83 // pred_check
          %p2688 = pneg %p268
        $region86: #{tpu_custom_call.1} parent=83 // pred_check_branch
          %2690 = sbr.rel (%p2688) target = $region88
        $region87: #{tpu_custom_call.1} parent=83 // pred_region
          %s2691 = sand.u32 %s253, 1
          %s2692 = scalar_lea.sflag [#allocation5], %s2691
          %s2693 = sand.u32 %s253, 1
          %s2694 = smul.addr %s2693, 64
          %s2695 = scalar_lea.vmem [#allocation11], %s2694
          %2696 = dma.done %s2692, 1024
        $region88: #{tpu_custom_call.1} parent=83 // pred_fallthru
          _
      $region84: #{tpu_custom_call.1} parent=5 // pred_fallthru
        _
    $region6: #{tpu_custom_call.1} parent=1 // loop_footer
      %s28 = sadd.s32 1, %s24
    $region7: #{tpu_custom_call.1} parent=1 // loop_footer_branch
      %23 = sbr.rel target = $region3
    $region8: #{tpu_custom_call.1} parent=1 // loop_exit
      _
    %2697 = vsyncpa [#allocation4], 1
    %s2698 = scalar_lea.sflag [#allocation4], 1
    %2699 = vsyncpa %s2698, 1
    %2700 = vsyncpa [#allocation7], 1
    %2701 = vsyncpa [#allocation10], 1
    %2702 = vsyncpa [#allocation5], 1
    %s2703 = scalar_lea.sflag [#allocation5], 1
    %2704 = vsyncpa %s2703, 1

</llo_original>
